<compile_context>
chip_gen: v7x
topology: tpu7x:2x2x1
jax: 0.10.0
libtpu: 0.0.40
codegen_flags: <defaults>
</compile_context>

<pallas_src>
import functools

import jax
import jax.numpy as jnp
from jax.experimental import pallas as pl
from jax.experimental.pallas import tpu as pltpu


def _silu(v):
    # SiLU with the divide moved to the EUP path (exp + approx reciprocal).
    return v * pl.reciprocal(1.0 + jnp.exp(-v), approx=True)


# --------------------------------------------------------------------------
# Fused kernel: conv1(1x1)+BN+SiLU -> maxpool pyramid -> conv2(1x1)+BN+SiLU
# --------------------------------------------------------------------------
def _spp_kernel(col_ref, x_ref, w1_ref, b1_ref, w2_ref, b2_ref, o_ref, *,
                width, radii):
    # col_ref: (1, HW) int32            column index of each flattened pixel
    # x_ref:   (1, C, HW) bf16          one batch element, pixels on lanes
    # w1_ref:  (hid, C) bf16            conv1 weight, BN scale folded in
    # b1_ref:  (hid, 1) f32             conv1 folded BN shift
    # w2_ref:  (cout, n_br*hid) bf16    conv2 weight, BN scale folded in
    # b2_ref:  (cout, 1) f32            conv2 folded BN shift
    # o_ref:   (1, cout, HW) f32
    x = x_ref[0]                                                    # [C, HW] bf16

    # conv1 (1x1) as a lane-dense bf16 MXU matmul with f32 accumulation
    y = jnp.dot(w1_ref[...], x, preferred_element_type=jnp.float32)  # [hid, HW] f32
    y = _silu(y + b1_ref[...])

    hid, hw = y.shape
    neg = jnp.float32(-jnp.inf)

    # (1, HW) boundary masks; jnp.where broadcasts them over the sublane axis.
    col = col_ref[...]                                              # (1, HW)
    idx = jax.lax.broadcasted_iota(jnp.int32, (1, hw), 1)
    at_left = col == 0
    at_right = col == width - 1
    at_top = idx < width
    at_bottom = idx >= hw - width

    def pool3(a):
        # Separable 3x3 max with -inf outside the image (== MaxPool2d(3,1,1)).
        # Neighbor taps are XLU rotations of the flat slab; wrap-around values
        # land exactly on the masked boundary positions.
        rn = jnp.where(at_right, neg, pltpu.roll(a, shift=hw - 1, axis=1))      # col+1
        ln = jnp.where(at_left, neg, pltpu.roll(a, shift=1, axis=1))            # col-1
        h = jnp.maximum(a, jnp.maximum(rn, ln))
        dn = jnp.where(at_bottom, neg, pltpu.roll(h, shift=hw - width, axis=1))  # row+1
        un = jnp.where(at_top, neg, pltpu.roll(h, shift=width, axis=1))          # row-1
        return jnp.maximum(h, jnp.maximum(dn, un))

    # pool(2r+1) = pool3 applied r times; keep all branches for the fused conv2.
    branches = [y]
    cur = y
    prev_r = 0
    for r in radii:                       # radii = ks//2, nondecreasing
        for _ in range(r - prev_r):
            cur = pool3(cur)
        prev_r = r
        branches.append(cur)

    # conv2: single K = n_br*hid matmul over the concatenated branch slab.
    cat = jnp.concatenate(branches, axis=0).astype(jnp.bfloat16)    # [n_br*hid, HW]
    z = jnp.dot(w2_ref[...], cat, preferred_element_type=jnp.float32)
    z = z + b2_ref[...]
    o_ref[0] = _silu(z).astype(o_ref.dtype)


def _invariant_spec(block_shape, index_map, single_buffer):
    """BlockSpec for grid-invariant inputs; single-buffer them when supported."""
    if single_buffer and hasattr(pl, "Buffered"):
        try:
            return pl.BlockSpec(block_shape, index_map,
                                pipeline_mode=pl.Buffered(1))
        except Exception:                      # pragma: no cover - old Pallas
            pass
    return pl.BlockSpec(block_shape, index_map)


# --------------------------------------------------------------------------
# Wrapper: fold BN, build lane-dense bf16 views, launch the kernel
# --------------------------------------------------------------------------
@functools.partial(jax.jit,
                   static_argnames=("kernel_sizes", "eps", "single_buffer_weights"))
def spp_bottleneck_forward(x, w1, g1, b1, m1, v1, w2, g2, b2, m2, v2,
                           kernel_sizes=(3, 5, 7), eps=1e-5,
                           single_buffer_weights=True):
    """x: [B, C, H, W] NCHW float32.  Returns [B, out_ch, H, W] float32."""
    bsz, c, h, w = x.shape
    hid = w1.shape[0]
    cout = w2.shape[0]
    n_br = len(kernel_sizes) + 1
    assert w1.shape[:2] == (hid, c)
    assert w2.shape[1] == n_br * hid
    for ks_ in kernel_sizes:
        assert ks_ % 2 == 1, "SPP kernel sizes must be odd (stride-1, pad=ks//2)"
    radii = tuple(k // 2 for k in kernel_sizes)
    assert radii == tuple(sorted(radii)), "kernel_sizes must be nondecreasing"
    hw = h * w

    # Fold eval-mode BN (running stats) into conv weights; keep only a shift.
    s1 = g1 / jnp.sqrt(v1 + eps)
    w1s = (w1[:, :, 0, 0] * s1[:, None]).astype(jnp.bfloat16)       # [hid, C]
    sh1 = (b1 - m1 * s1).reshape(hid, 1).astype(jnp.float32)

    s2 = g2 / jnp.sqrt(v2 + eps)
    w2s = (w2[:, :, 0, 0] * s2[:, None]).astype(jnp.bfloat16)       # [cout, n_br*hid]
    sh2 = (b2 - m2 * s2).reshape(cout, 1).astype(jnp.float32)

    # NCHW is already channels-major / pixels-contiguous: this reshape is free.
    # bf16 activations halve the HBM read of x and feed the MXU at native rate.
    xr = x.reshape(bsz, c, hw).astype(jnp.bfloat16)
    col_ids = (jnp.arange(hw, dtype=jnp.int32) % w).reshape(1, hw)

    # Scoped-VMEM budget from the actual buffers (2x headroom), clamped to a
    # range that is safe on every generation (v7x physical VMEM = 64 MiB).
    wbuf = 1 if single_buffer_weights else 2
    blk = 2 * (c * hw * 2 + cout * hw * 4)                       # pipelined x / out
    wts = wbuf * (hw * 4 + hid * c * 2 + hid * 4
                  + cout * n_br * hid * 2 + cout * 4)            # invariant inputs
    live = (n_br + 1) * hid * hw * 4 + n_br * hid * hw * 2 + cout * hw * 4
    vmem_limit = int(max(32 * 1024 * 1024,
                         min(64 * 1024 * 1024, 2 * (blk + wts + live))))

    inv = functools.partial(_invariant_spec, single_buffer=single_buffer_weights)
    kern = functools.partial(_spp_kernel, width=w, radii=radii)
    out = pl.pallas_call(
        kern,
        out_shape=jax.ShapeDtypeStruct((bsz, cout, hw), jnp.float32),
        grid=(bsz,),
        in_specs=[
            inv((1, hw), lambda b: (0, 0)),
            pl.BlockSpec((1, c, hw), lambda b: (b, 0, 0)),
            inv((hid, c), lambda b: (0, 0)),
            inv((hid, 1), lambda b: (0, 0)),
            inv((cout, n_br * hid), lambda b: (0, 0)),
            inv((cout, 1), lambda b: (0, 0)),
        ],
        out_specs=pl.BlockSpec((1, cout, hw), lambda b: (b, 0, 0)),
        compiler_params=pltpu.CompilerParams(
            dimension_semantics=("parallel",),
            vmem_limit_bytes=vmem_limit),
    )(col_ids, xr, w1s, sh1, w2s, sh2)

    return out.reshape(bsz, cout, h, w)


# --------------------------------------------------------------------------
# Pure-JAX f32 reference (sanity check against the fused kernel)
# --------------------------------------------------------------------------
def spp_bottleneck_reference(x, w1, g1, b1, m1, v1, w2, g2, b2, m2, v2,
                             kernel_sizes=(3, 5, 7), eps=1e-5):
    def baseconv(xx, wgt, g, b, m, v):
        y = jax.lax.conv_general_dilated(
            xx, wgt, window_strides=(1, 1), padding="VALID",
            dimension_numbers=("NCHW", "OIHW", "NCHW"))
        s = g / jnp.sqrt(v + eps)
        y = y * s.reshape(1, -1, 1, 1) + (b - m * s).reshape(1, -1, 1, 1)
        return y * jax.nn.sigmoid(y)

    y = baseconv(x, w1, g1, b1, m1, v1)
    branches = [y]
    for ks_ in kernel_sizes:
        p = ks_ // 2
        branches.append(jax.lax.reduce_window(
            y, -jnp.inf, jax.lax.max,
            window_dimensions=(1, 1, ks_, ks_), window_strides=(1, 1, 1, 1),
            padding=((0, 0), (0, 0), (p, p), (p, p))))
    yc = jnp.concatenate(branches, axis=1)
    return baseconv(yc, w2, g2, b2, m2, v2)


if __name__ == "__main__":
    # SPPBottleneck(in_channels=16, out_channels=32, kernel_sizes=(3,5,7), act='silu')
    B, C, H, W = 2, 16, 16, 16
    COUT = 32
    KSIZES = (3, 5, 7)
    HID = C // 2
    C2 = HID * (len(KSIZES) + 1)

    key = jax.random.PRNGKey(0)
    ks = jax.random.split(key, 12)
    x = jax.random.normal(ks[0], (B, C, H, W), jnp.float32)

    w1 = 0.2 * jax.random.normal(ks[1], (HID, C, 1, 1), jnp.float32)
    g1 = 1.0 + 0.1 * jax.random.normal(ks[2], (HID,), jnp.float32)
    b1 = 0.1 * jax.random.normal(ks[3], (HID,), jnp.float32)
    m1 = 0.05 * jax.random.normal(ks[4], (HID,), jnp.float32)
    v1 = jnp.abs(1.0 + 0.1 * jax.random.normal(ks[5], (HID,), jnp.float32))

    w2 = 0.2 * jax.random.normal(ks[6], (COUT, C2, 1, 1), jnp.float32)
    g2 = 1.0 + 0.1 * jax.random.normal(ks[7], (COUT,), jnp.float32)
    b2 = 0.1 * jax.random.normal(ks[8], (COUT,), jnp.float32)
    m2 = 0.05 * jax.random.normal(ks[9], (COUT,), jnp.float32)
    v2 = jnp.abs(1.0 + 0.1 * jax.random.normal(ks[10], (COUT,), jnp.float32))

    args = (x, w1, g1, b1, m1, v1, w2, g2, b2, m2, v2)

    try:
        out = jax.block_until_ready(
            spp_bottleneck_forward(*args, kernel_sizes=KSIZES))
    except Exception:
        # Fallback for Pallas builds that reject single-buffered invariant inputs.
        out = jax.block_until_ready(
            spp_bottleneck_forward(*args, kernel_sizes=KSIZES,
                                   single_buffer_weights=False))

    ref = jax.block_until_ready(
        spp_bottleneck_reference(*args, kernel_sizes=KSIZES))

    assert out.shape == (B, COUT, H, W), out.shape
    # bf16 MXU inputs vs an all-f32 reference: loosened (abs + rel) tolerance.
    err = float(jnp.max(jnp.abs(out - ref)))
    scale = float(jnp.max(jnp.abs(ref)))
    assert err <= 5e-2 + 2e-2 * scale, (err, scale)
    print("KERNEL_OK")
</pallas_src>

<mosaic_0001>
module attributes {stable_mosaic.version = 11 : i64} {
  func.func @_spp_kernel(%arg0: i32, %arg1: memref<1x256xi32, #tpu.memory_space<vmem>>, %arg2: memref<1x16x256xbf16, #tpu.memory_space<vmem>>, %arg3: memref<8x16xbf16, #tpu.memory_space<vmem>>, %arg4: memref<8x1xf32, #tpu.memory_space<vmem>>, %arg5: memref<32x32xbf16, #tpu.memory_space<vmem>>, %arg6: memref<32x1xf32, #tpu.memory_space<vmem>>, %arg7: memref<1x32x256xf32, #tpu.memory_space<vmem>>) attributes {dimension_semantics = [#tpu.dimension_semantics<parallel>], iteration_bounds = array<i64: 2>, scalar_prefetch = 0 : i64, scratch_operands = 0 : i64, tpu.core_type = #tpu.core_type<tc>, window_params = [{pipeline_mode = #tpu.pipeline_mode<synchronous>, transform_indices = @transform_0, window_bounds = array<i64: 1, 256>}, {transform_indices = @transform_1, window_bounds = array<i64: 1, 16, 256>}, {pipeline_mode = #tpu.pipeline_mode<synchronous>, transform_indices = @transform_2, window_bounds = array<i64: 8, 16>}, {pipeline_mode = #tpu.pipeline_mode<synchronous>, transform_indices = @transform_3, window_bounds = array<i64: 8, 1>}, {pipeline_mode = #tpu.pipeline_mode<synchronous>, transform_indices = @transform_4, window_bounds = array<i64: 32, 32>}, {pipeline_mode = #tpu.pipeline_mode<synchronous>, transform_indices = @transform_5, window_bounds = array<i64: 32, 1>}, {transform_indices = @transform_6, window_bounds = array<i64: 1, 32, 256>}]} {
    %c0 = arith.constant 0 : index
    %c0_0 = arith.constant 0 : index
    %c0_1 = arith.constant 0 : index
    %0 = vector.load %arg2[%c0, %c0_0, %c0_1] : memref<1x16x256xbf16, #tpu.memory_space<vmem>>, vector<1x16x256xbf16>
    %1 = vector.shape_cast %0 : vector<1x16x256xbf16> to vector<16x256xbf16>
    %c0_2 = arith.constant 0 : index
    %c0_3 = arith.constant 0 : index
    %2 = vector.load %arg3[%c0_2, %c0_3] : memref<8x16xbf16, #tpu.memory_space<vmem>>, vector<8x16xbf16>
    %cst = arith.constant dense<0.000000e+00> : vector<8x256xf32>
    %3 = tpu.matmul %2, %1, %cst {dimension_numbers = #tpu.dot_dimension_numbers<[1], [0], [0], [1], [0, 0, 1, 1], [], []>} : vector<8x16xbf16>, vector<16x256xbf16>, vector<8x256xf32> -> vector<8x256xf32>
    %c0_4 = arith.constant 0 : index
    %c0_5 = arith.constant 0 : index
    %4 = vector.load %arg4[%c0_4, %c0_5] : memref<8x1xf32, #tpu.memory_space<vmem>>, vector<8x1xf32>
    %5 = vector.broadcast %4 : vector<8x1xf32> to vector<8x256xf32>
    %6 = arith.addf %3, %5 : vector<8x256xf32>
    %cst_6 = arith.constant 0.000000e+00 : f32
    %7 = vector.broadcast %cst_6 : f32 to vector<8x256xf32>
    %8 = arith.subf %7, %6 : vector<8x256xf32>
    %9 = math.exp %8 : vector<8x256xf32>
    %cst_7 = arith.constant 1.000000e+00 : f32
    %10 = vector.broadcast %cst_7 : f32 to vector<8x256xf32>
    %11 = arith.addf %10, %9 : vector<8x256xf32>
    %12 = tpu.reciprocal %11 {approx = true} : vector<8x256xf32> -> vector<8x256xf32>
    %13 = arith.mulf %6, %12 : vector<8x256xf32>
    %c0_8 = arith.constant 0 : index
    %c0_9 = arith.constant 0 : index
    %14 = vector.load %arg1[%c0_8, %c0_9] : memref<1x256xi32, #tpu.memory_space<vmem>>, vector<1x256xi32>
    %15 = tpu.iota {dimensions = array<i32: 1>} : vector<1x256xi32>
    %c0_i32 = arith.constant 0 : i32
    %16 = vector.broadcast %c0_i32 : i32 to vector<1x256xi32>
    %17 = arith.cmpi eq, %14, %16 : vector<1x256xi32>
    %c15_i32 = arith.constant 15 : i32
    %18 = vector.broadcast %c15_i32 : i32 to vector<1x256xi32>
    %19 = arith.cmpi eq, %14, %18 : vector<1x256xi32>
    %c16_i32 = arith.constant 16 : i32
    %20 = vector.broadcast %c16_i32 : i32 to vector<1x256xi32>
    %21 = arith.cmpi slt, %15, %20 : vector<1x256xi32>
    %c240_i32 = arith.constant 240 : i32
    %22 = vector.broadcast %c240_i32 : i32 to vector<1x256xi32>
    %23 = arith.cmpi sge, %15, %22 : vector<1x256xi32>
    %c255_i32 = arith.constant 255 : i32
    %24 = tpu.dynamic_rotate %13 by %c255_i32 dim 1 : vector<8x256xf32>, i32 -> vector<8x256xf32>
    %cst_10 = arith.constant 0xFF800000 : f32
    %25 = vector.shape_cast %19 : vector<1x256xi1> to vector<1x256xi1>
    %26 = vector.broadcast %25 : vector<1x256xi1> to vector<8x256xi1>
    %27 = vector.broadcast %cst_10 : f32 to vector<8x256xf32>
    %28 = arith.select %26, %27, %24 : vector<8x256xi1>, vector<8x256xf32>
    %c1_i32 = arith.constant 1 : i32
    %29 = tpu.dynamic_rotate %13 by %c1_i32 dim 1 : vector<8x256xf32>, i32 -> vector<8x256xf32>
    %cst_11 = arith.constant 0xFF800000 : f32
    %30 = vector.shape_cast %17 : vector<1x256xi1> to vector<1x256xi1>
    %31 = vector.broadcast %30 : vector<1x256xi1> to vector<8x256xi1>
    %32 = vector.broadcast %cst_11 : f32 to vector<8x256xf32>
    %33 = arith.select %31, %32, %29 : vector<8x256xi1>, vector<8x256xf32>
    %34 = arith.maximumf %28, %33 : vector<8x256xf32>
    %35 = arith.maximumf %13, %34 : vector<8x256xf32>
    %c240_i32_12 = arith.constant 240 : i32
    %36 = tpu.dynamic_rotate %35 by %c240_i32_12 dim 1 : vector<8x256xf32>, i32 -> vector<8x256xf32>
    %cst_13 = arith.constant 0xFF800000 : f32
    %37 = vector.shape_cast %23 : vector<1x256xi1> to vector<1x256xi1>
    %38 = vector.broadcast %37 : vector<1x256xi1> to vector<8x256xi1>
    %39 = vector.broadcast %cst_13 : f32 to vector<8x256xf32>
    %40 = arith.select %38, %39, %36 : vector<8x256xi1>, vector<8x256xf32>
    %c16_i32_14 = arith.constant 16 : i32
    %41 = tpu.dynamic_rotate %35 by %c16_i32_14 dim 1 : vector<8x256xf32>, i32 -> vector<8x256xf32>
    %cst_15 = arith.constant 0xFF800000 : f32
    %42 = vector.shape_cast %21 : vector<1x256xi1> to vector<1x256xi1>
    %43 = vector.broadcast %42 : vector<1x256xi1> to vector<8x256xi1>
    %44 = vector.broadcast %cst_15 : f32 to vector<8x256xf32>
    %45 = arith.select %43, %44, %41 : vector<8x256xi1>, vector<8x256xf32>
    %46 = arith.maximumf %40, %45 : vector<8x256xf32>
    %47 = arith.maximumf %35, %46 : vector<8x256xf32>
    %c255_i32_16 = arith.constant 255 : i32
    %48 = tpu.dynamic_rotate %47 by %c255_i32_16 dim 1 : vector<8x256xf32>, i32 -> vector<8x256xf32>
    %cst_17 = arith.constant 0xFF800000 : f32
    %49 = vector.shape_cast %19 : vector<1x256xi1> to vector<1x256xi1>
    %50 = vector.broadcast %49 : vector<1x256xi1> to vector<8x256xi1>
    %51 = vector.broadcast %cst_17 : f32 to vector<8x256xf32>
    %52 = arith.select %50, %51, %48 : vector<8x256xi1>, vector<8x256xf32>
    %c1_i32_18 = arith.constant 1 : i32
    %53 = tpu.dynamic_rotate %47 by %c1_i32_18 dim 1 : vector<8x256xf32>, i32 -> vector<8x256xf32>
    %cst_19 = arith.constant 0xFF800000 : f32
    %54 = vector.shape_cast %17 : vector<1x256xi1> to vector<1x256xi1>
    %55 = vector.broadcast %54 : vector<1x256xi1> to vector<8x256xi1>
    %56 = vector.broadcast %cst_19 : f32 to vector<8x256xf32>
    %57 = arith.select %55, %56, %53 : vector<8x256xi1>, vector<8x256xf32>
    %58 = arith.maximumf %52, %57 : vector<8x256xf32>
    %59 = arith.maximumf %47, %58 : vector<8x256xf32>
    %c240_i32_20 = arith.constant 240 : i32
    %60 = tpu.dynamic_rotate %59 by %c240_i32_20 dim 1 : vector<8x256xf32>, i32 -> vector<8x256xf32>
    %cst_21 = arith.constant 0xFF800000 : f32
    %61 = vector.shape_cast %23 : vector<1x256xi1> to vector<1x256xi1>
    %62 = vector.broadcast %61 : vector<1x256xi1> to vector<8x256xi1>
    %63 = vector.broadcast %cst_21 : f32 to vector<8x256xf32>
    %64 = arith.select %62, %63, %60 : vector<8x256xi1>, vector<8x256xf32>
    %c16_i32_22 = arith.constant 16 : i32
    %65 = tpu.dynamic_rotate %59 by %c16_i32_22 dim 1 : vector<8x256xf32>, i32 -> vector<8x256xf32>
    %cst_23 = arith.constant 0xFF800000 : f32
    %66 = vector.shape_cast %21 : vector<1x256xi1> to vector<1x256xi1>
    %67 = vector.broadcast %66 : vector<1x256xi1> to vector<8x256xi1>
    %68 = vector.broadcast %cst_23 : f32 to vector<8x256xf32>
    %69 = arith.select %67, %68, %65 : vector<8x256xi1>, vector<8x256xf32>
    %70 = arith.maximumf %64, %69 : vector<8x256xf32>
    %71 = arith.maximumf %59, %70 : vector<8x256xf32>
    %c255_i32_24 = arith.constant 255 : i32
    %72 = tpu.dynamic_rotate %71 by %c255_i32_24 dim 1 : vector<8x256xf32>, i32 -> vector<8x256xf32>
    %cst_25 = arith.constant 0xFF800000 : f32
    %73 = vector.shape_cast %19 : vector<1x256xi1> to vector<1x256xi1>
    %74 = vector.broadcast %73 : vector<1x256xi1> to vector<8x256xi1>
    %75 = vector.broadcast %cst_25 : f32 to vector<8x256xf32>
    %76 = arith.select %74, %75, %72 : vector<8x256xi1>, vector<8x256xf32>
    %c1_i32_26 = arith.constant 1 : i32
    %77 = tpu.dynamic_rotate %71 by %c1_i32_26 dim 1 : vector<8x256xf32>, i32 -> vector<8x256xf32>
    %cst_27 = arith.constant 0xFF800000 : f32
    %78 = vector.shape_cast %17 : vector<1x256xi1> to vector<1x256xi1>
    %79 = vector.broadcast %78 : vector<1x256xi1> to vector<8x256xi1>
    %80 = vector.broadcast %cst_27 : f32 to vector<8x256xf32>
    %81 = arith.select %79, %80, %77 : vector<8x256xi1>, vector<8x256xf32>
    %82 = arith.maximumf %76, %81 : vector<8x256xf32>
    %83 = arith.maximumf %71, %82 : vector<8x256xf32>
    %c240_i32_28 = arith.constant 240 : i32
    %84 = tpu.dynamic_rotate %83 by %c240_i32_28 dim 1 : vector<8x256xf32>, i32 -> vector<8x256xf32>
    %cst_29 = arith.constant 0xFF800000 : f32
    %85 = vector.shape_cast %23 : vector<1x256xi1> to vector<1x256xi1>
    %86 = vector.broadcast %85 : vector<1x256xi1> to vector<8x256xi1>
    %87 = vector.broadcast %cst_29 : f32 to vector<8x256xf32>
    %88 = arith.select %86, %87, %84 : vector<8x256xi1>, vector<8x256xf32>
    %c16_i32_30 = arith.constant 16 : i32
    %89 = tpu.dynamic_rotate %83 by %c16_i32_30 dim 1 : vector<8x256xf32>, i32 -> vector<8x256xf32>
    %cst_31 = arith.constant 0xFF800000 : f32
    %90 = vector.shape_cast %21 : vector<1x256xi1> to vector<1x256xi1>
    %91 = vector.broadcast %90 : vector<1x256xi1> to vector<8x256xi1>
    %92 = vector.broadcast %cst_31 : f32 to vector<8x256xf32>
    %93 = arith.select %91, %92, %89 : vector<8x256xi1>, vector<8x256xf32>
    %94 = arith.maximumf %88, %93 : vector<8x256xf32>
    %95 = arith.maximumf %83, %94 : vector<8x256xf32>
    %96 = tpu.concatenate %13, %47, %71, %95 in 0 : vector<8x256xf32>, vector<8x256xf32>, vector<8x256xf32>, vector<8x256xf32> -> vector<32x256xf32>
    %97 = arith.truncf %96 : vector<32x256xf32> to vector<32x256xbf16>
    %c0_32 = arith.constant 0 : index
    %c0_33 = arith.constant 0 : index
    %98 = vector.load %arg5[%c0_32, %c0_33] : memref<32x32xbf16, #tpu.memory_space<vmem>>, vector<32x32xbf16>
    %cst_34 = arith.constant dense<0.000000e+00> : vector<32x256xf32>
    %99 = tpu.matmul %98, %97, %cst_34 {dimension_numbers = #tpu.dot_dimension_numbers<[1], [0], [0], [1], [0, 0, 1, 1], [], []>} : vector<32x32xbf16>, vector<32x256xbf16>, vector<32x256xf32> -> vector<32x256xf32>
    %c0_35 = arith.constant 0 : index
    %c0_36 = arith.constant 0 : index
    %100 = vector.load %arg6[%c0_35, %c0_36] : memref<32x1xf32, #tpu.memory_space<vmem>>, vector<32x1xf32>
    %101 = vector.broadcast %100 : vector<32x1xf32> to vector<32x256xf32>
    %102 = arith.addf %99, %101 : vector<32x256xf32>
    %cst_37 = arith.constant 0.000000e+00 : f32
    %103 = vector.broadcast %cst_37 : f32 to vector<32x256xf32>
    %104 = arith.subf %103, %102 : vector<32x256xf32>
    %105 = math.exp %104 : vector<32x256xf32>
    %cst_38 = arith.constant 1.000000e+00 : f32
    %106 = vector.broadcast %cst_38 : f32 to vector<32x256xf32>
    %107 = arith.addf %106, %105 : vector<32x256xf32>
    %108 = tpu.reciprocal %107 {approx = true} : vector<32x256xf32> -> vector<32x256xf32>
    %109 = arith.mulf %102, %108 : vector<32x256xf32>
    %c0_39 = arith.constant 0 : index
    %c0_40 = arith.constant 0 : index
    %c0_41 = arith.constant 0 : index
    %110 = vector.load %arg7[%c0_39, %c0_40, %c0_41] : memref<1x32x256xf32, #tpu.memory_space<vmem>>, vector<1x32x256xf32>
    %111 = vector.shape_cast %110 : vector<1x32x256xf32> to vector<32x256xf32>
    %112 = vector.shape_cast %109 : vector<32x256xf32> to vector<1x32x256xf32>
    tpu.vector_store %arg7[%c0_39, %c0_40, %c0_41], %112 {strides = array<i32>} : memref<1x32x256xf32, #tpu.memory_space<vmem>>, vector<1x32x256xf32>,
    return
  }
  func.func @transform_0(%arg0: i32) -> (i32, i32) {
    %c0_i32 = arith.constant 0 : i32
    %c0_i32_0 = arith.constant 0 : i32
    %c0_i32_1 = arith.constant 0 : i32
    return %c0_i32, %c0_i32_0 : i32, i32
  }
  func.func @transform_1(%arg0: i32) -> (i32, i32, i32) {
    %c0_i32 = arith.constant 0 : i32
    %c0_i32_0 = arith.constant 0 : i32
    %c0_i32_1 = arith.constant 0 : i32
    return %arg0, %c0_i32, %c0_i32_0 : i32, i32, i32
  }
  func.func @transform_2(%arg0: i32) -> (i32, i32) {
    %c0_i32 = arith.constant 0 : i32
    %c0_i32_0 = arith.constant 0 : i32
    %c0_i32_1 = arith.constant 0 : i32
    return %c0_i32, %c0_i32_0 : i32, i32
  }
  func.func @transform_3(%arg0: i32) -> (i32, i32) {
    %c0_i32 = arith.constant 0 : i32
    %c0_i32_0 = arith.constant 0 : i32
    %c0_i32_1 = arith.constant 0 : i32
    return %c0_i32, %c0_i32_0 : i32, i32
  }
  func.func @transform_4(%arg0: i32) -> (i32, i32) {
    %c0_i32 = arith.constant 0 : i32
    %c0_i32_0 = arith.constant 0 : i32
    %c0_i32_1 = arith.constant 0 : i32
    return %c0_i32, %c0_i32_0 : i32, i32
  }
  func.func @transform_5(%arg0: i32) -> (i32, i32) {
    %c0_i32 = arith.constant 0 : i32
    %c0_i32_0 = arith.constant 0 : i32
    %c0_i32_1 = arith.constant 0 : i32
    return %c0_i32, %c0_i32_0 : i32, i32
  }
  func.func @transform_6(%arg0: i32) -> (i32, i32, i32) {
    %c0_i32 = arith.constant 0 : i32
    %c0_i32_0 = arith.constant 0 : i32
    %c0_i32_1 = arith.constant 0 : i32
    return %arg0, %c0_i32, %c0_i32_0 : i32, i32, i32
  }
}

module attributes {stable_mosaic.version = 11 : i64} {
  func.func @_spp_kernel(%arg0: i32, %arg1: memref<1x256xi32, #tpu.memory_space<vmem>>, %arg2: memref<1x16x256xbf16, #tpu.memory_space<vmem>>, %arg3: memref<8x16xbf16, #tpu.memory_space<vmem>>, %arg4: memref<8x1xf32, #tpu.memory_space<vmem>>, %arg5: memref<32x32xbf16, #tpu.memory_space<vmem>>, %arg6: memref<32x1xf32, #tpu.memory_space<vmem>>, %arg7: memref<1x32x256xf32, #tpu.memory_space<vmem>>) attributes {dimension_semantics = [#tpu.dimension_semantics<parallel>], iteration_bounds = array<i64: 2>, scalar_prefetch = 0 : i64, scratch_operands = 0 : i64, tpu.core_type = #tpu.core_type<tc>, window_params = [{pipeline_mode = #tpu.pipeline_mode<synchronous>, transform_indices = @transform_0, window_bounds = array<i64: 1, 256>}, {transform_indices = @transform_1, window_bounds = array<i64: 1, 16, 256>}, {pipeline_mode = #tpu.pipeline_mode<synchronous>, transform_indices = @transform_2, window_bounds = array<i64: 8, 16>}, {pipeline_mode = #tpu.pipeline_mode<synchronous>, transform_indices = @transform_3, window_bounds = array<i64: 8, 1>}, {pipeline_mode = #tpu.pipeline_mode<synchronous>, transform_indices = @transform_4, window_bounds = array<i64: 32, 32>}, {pipeline_mode = #tpu.pipeline_mode<synchronous>, transform_indices = @transform_5, window_bounds = array<i64: 32, 1>}, {transform_indices = @transform_6, window_bounds = array<i64: 1, 32, 256>}]} {
    %c0 = arith.constant 0 : index
    %c0_0 = arith.constant 0 : index
    %c0_1 = arith.constant 0 : index
    %0 = vector.load %arg2[%c0, %c0_0, %c0_1] : memref<1x16x256xbf16, #tpu.memory_space<vmem>>, vector<1x16x256xbf16>
    %1 = vector.shape_cast %0 : vector<1x16x256xbf16> to vector<16x256xbf16>
    %c0_2 = arith.constant 0 : index
    %c0_3 = arith.constant 0 : index
    %2 = vector.load %arg3[%c0_2, %c0_3] : memref<8x16xbf16, #tpu.memory_space<vmem>>, vector<8x16xbf16>
    %cst = arith.constant dense<0.000000e+00> : vector<8x256xf32>
    %3 = tpu.matmul %2, %1, %cst {dimension_numbers = #tpu.dot_dimension_numbers<[1], [0], [0], [1], [0, 0, 1, 1], [], []>} : vector<8x16xbf16>, vector<16x256xbf16>, vector<8x256xf32> -> vector<8x256xf32>
    %c0_4 = arith.constant 0 : index
    %c0_5 = arith.constant 0 : index
    %4 = vector.load %arg4[%c0_4, %c0_5] : memref<8x1xf32, #tpu.memory_space<vmem>>, vector<8x1xf32>
    %5 = vector.broadcast %4 : vector<8x1xf32> to vector<8x256xf32>
    %6 = arith.addf %3, %5 : vector<8x256xf32>
    %cst_6 = arith.constant 0.000000e+00 : f32
    %7 = vector.broadcast %cst_6 : f32 to vector<8x256xf32>
    %8 = arith.subf %7, %6 : vector<8x256xf32>
    %9 = math.exp %8 : vector<8x256xf32>
    %cst_7 = arith.constant 1.000000e+00 : f32
    %10 = vector.broadcast %cst_7 : f32 to vector<8x256xf32>
    %11 = arith.addf %10, %9 : vector<8x256xf32>
    %12 = tpu.reciprocal %11 {approx = true} : vector<8x256xf32> -> vector<8x256xf32>
    %13 = arith.mulf %6, %12 : vector<8x256xf32>
    %c0_8 = arith.constant 0 : index
    %c0_9 = arith.constant 0 : index
    %14 = vector.load %arg1[%c0_8, %c0_9] : memref<1x256xi32, #tpu.memory_space<vmem>>, vector<1x256xi32>
    %15 = tpu.iota {dimensions = array<i32: 1>} : vector<1x256xi32>
    %c0_i32 = arith.constant 0 : i32
    %16 = vector.broadcast %c0_i32 : i32 to vector<1x256xi32>
    %17 = arith.cmpi eq, %14, %16 : vector<1x256xi32>
    %c15_i32 = arith.constant 15 : i32
    %18 = vector.broadcast %c15_i32 : i32 to vector<1x256xi32>
    %19 = arith.cmpi eq, %14, %18 : vector<1x256xi32>
    %c16_i32 = arith.constant 16 : i32
    %20 = vector.broadcast %c16_i32 : i32 to vector<1x256xi32>
    %21 = arith.cmpi slt, %15, %20 : vector<1x256xi32>
    %c240_i32 = arith.constant 240 : i32
    %22 = vector.broadcast %c240_i32 : i32 to vector<1x256xi32>
    %23 = arith.cmpi sge, %15, %22 : vector<1x256xi32>
    %c255_i32 = arith.constant 255 : i32
    %24 = tpu.dynamic_rotate %13 by %c255_i32 dim 1 : vector<8x256xf32>, i32 -> vector<8x256xf32>
    %cst_10 = arith.constant 0xFF800000 : f32
    %25 = vector.shape_cast %19 : vector<1x256xi1> to vector<1x256xi1>
    %26 = vector.broadcast %25 : vector<1x256xi1> to vector<8x256xi1>
    %27 = vector.broadcast %cst_10 : f32 to vector<8x256xf32>
    %28 = arith.select %26, %27, %24 : vector<8x256xi1>, vector<8x256xf32>
    %c1_i32 = arith.constant 1 : i32
    %29 = tpu.dynamic_rotate %13 by %c1_i32 dim 1 : vector<8x256xf32>, i32 -> vector<8x256xf32>
    %cst_11 = arith.constant 0xFF800000 : f32
    %30 = vector.shape_cast %17 : vector<1x256xi1> to vector<1x256xi1>
    %31 = vector.broadcast %30 : vector<1x256xi1> to vector<8x256xi1>
    %32 = vector.broadcast %cst_11 : f32 to vector<8x256xf32>
    %33 = arith.select %31, %32, %29 : vector<8x256xi1>, vector<8x256xf32>
    %34 = arith.maximumf %28, %33 : vector<8x256xf32>
    %35 = arith.maximumf %13, %34 : vector<8x256xf32>
    %c240_i32_12 = arith.constant 240 : i32
    %36 = tpu.dynamic_rotate %35 by %c240_i32_12 dim 1 : vector<8x256xf32>, i32 -> vector<8x256xf32>
    %cst_13 = arith.constant 0xFF800000 : f32
    %37 = vector.shape_cast %23 : vector<1x256xi1> to vector<1x256xi1>
    %38 = vector.broadcast %37 : vector<1x256xi1> to vector<8x256xi1>
    %39 = vector.broadcast %cst_13 : f32 to vector<8x256xf32>
    %40 = arith.select %38, %39, %36 : vector<8x256xi1>, vector<8x256xf32>
    %c16_i32_14 = arith.constant 16 : i32
    %41 = tpu.dynamic_rotate %35 by %c16_i32_14 dim 1 : vector<8x256xf32>, i32 -> vector<8x256xf32>
    %cst_15 = arith.constant 0xFF800000 : f32
    %42 = vector.shape_cast %21 : vector<1x256xi1> to vector<1x256xi1>
    %43 = vector.broadcast %42 : vector<1x256xi1> to vector<8x256xi1>
    %44 = vector.broadcast %cst_15 : f32 to vector<8x256xf32>
    %45 = arith.select %43, %44, %41 : vector<8x256xi1>, vector<8x256xf32>
    %46 = arith.maximumf %40, %45 : vector<8x256xf32>
    %47 = arith.maximumf %35, %46 : vector<8x256xf32>
    %c255_i32_16 = arith.constant 255 : i32
    %48 = tpu.dynamic_rotate %47 by %c255_i32_16 dim 1 : vector<8x256xf32>, i32 -> vector<8x256xf32>
    %cst_17 = arith.constant 0xFF800000 : f32
    %49 = vector.shape_cast %19 : vector<1x256xi1> to vector<1x256xi1>
    %50 = vector.broadcast %49 : vector<1x256xi1> to vector<8x256xi1>
    %51 = vector.broadcast %cst_17 : f32 to vector<8x256xf32>
    %52 = arith.select %50, %51, %48 : vector<8x256xi1>, vector<8x256xf32>
    %c1_i32_18 = arith.constant 1 : i32
    %53 = tpu.dynamic_rotate %47 by %c1_i32_18 dim 1 : vector<8x256xf32>, i32 -> vector<8x256xf32>
    %cst_19 = arith.constant 0xFF800000 : f32
    %54 = vector.shape_cast %17 : vector<1x256xi1> to vector<1x256xi1>
    %55 = vector.broadcast %54 : vector<1x256xi1> to vector<8x256xi1>
    %56 = vector.broadcast %cst_19 : f32 to vector<8x256xf32>
    %57 = arith.select %55, %56, %53 : vector<8x256xi1>, vector<8x256xf32>
    %58 = arith.maximumf %52, %57 : vector<8x256xf32>
    %59 = arith.maximumf %47, %58 : vector<8x256xf32>
    %c240_i32_20 = arith.constant 240 : i32
    %60 = tpu.dynamic_rotate %59 by %c240_i32_20 dim 1 : vector<8x256xf32>, i32 -> vector<8x256xf32>
    %cst_21 = arith.constant 0xFF800000 : f32
    %61 = vector.shape_cast %23 : vector<1x256xi1> to vector<1x256xi1>
    %62 = vector.broadcast %61 : vector<1x256xi1> to vector<8x256xi1>
    %63 = vector.broadcast %cst_21 : f32 to vector<8x256xf32>
    %64 = arith.select %62, %63, %60 : vector<8x256xi1>, vector<8x256xf32>
    %c16_i32_22 = arith.constant 16 : i32
    %65 = tpu.dynamic_rotate %59 by %c16_i32_22 dim 1 : vector<8x256xf32>, i32 -> vector<8x256xf32>
    %cst_23 = arith.constant 0xFF800000 : f32
    %66 = vector.shape_cast %21 : vector<1x256xi1> to vector<1x256xi1>
    %67 = vector.broadcast %66 : vector<1x256xi1> to vector<8x256xi1>
    %68 = vector.broadcast %cst_23 : f32 to vector<8x256xf32>
    %69 = arith.select %67, %68, %65 : vector<8x256xi1>, vector<8x256xf32>
    %70 = arith.maximumf %64, %69 : vector<8x256xf32>
    %71 = arith.maximumf %59, %70 : vector<8x256xf32>
    %c255_i32_24 = arith.constant 255 : i32
    %72 = tpu.dynamic_rotate %71 by %c255_i32_24 dim 1 : vector<8x256xf32>, i32 -> vector<8x256xf32>
    %cst_25 = arith.constant 0xFF800000 : f32
    %73 = vector.shape_cast %19 : vector<1x256xi1> to vector<1x256xi1>
    %74 = vector.broadcast %73 : vector<1x256xi1> to vector<8x256xi1>
    %75 = vector.broadcast %cst_25 : f32 to vector<8x256xf32>
    %76 = arith.select %74, %75, %72 : vector<8x256xi1>, vector<8x256xf32>
    %c1_i32_26 = arith.constant 1 : i32
    %77 = tpu.dynamic_rotate %71 by %c1_i32_26 dim 1 : vector<8x256xf32>, i32 -> vector<8x256xf32>
    %cst_27 = arith.constant 0xFF800000 : f32
    %78 = vector.shape_cast %17 : vector<1x256xi1> to vector<1x256xi1>
    %79 = vector.broadcast %78 : vector<1x256xi1> to vector<8x256xi1>
    %80 = vector.broadcast %cst_27 : f32 to vector<8x256xf32>
    %81 = arith.select %79, %80, %77 : vector<8x256xi1>, vector<8x256xf32>
    %82 = arith.maximumf %76, %81 : vector<8x256xf32>
    %83 = arith.maximumf %71, %82 : vector<8x256xf32>
    %c240_i32_28 = arith.constant 240 : i32
    %84 = tpu.dynamic_rotate %83 by %c240_i32_28 dim 1 : vector<8x256xf32>, i32 -> vector<8x256xf32>
    %cst_29 = arith.constant 0xFF800000 : f32
    %85 = vector.shape_cast %23 : vector<1x256xi1> to vector<1x256xi1>
    %86 = vector.broadcast %85 : vector<1x256xi1> to vector<8x256xi1>
    %87 = vector.broadcast %cst_29 : f32 to vector<8x256xf32>
    %88 = arith.select %86, %87, %84 : vector<8x256xi1>, vector<8x256xf32>
    %c16_i32_30 = arith.constant 16 : i32
    %89 = tpu.dynamic_rotate %83 by %c16_i32_30 dim 1 : vector<8x256xf32>, i32 -> vector<8x256xf32>
    %cst_31 = arith.constant 0xFF800000 : f32
    %90 = vector.shape_cast %21 : vector<1x256xi1> to vector<1x256xi1>
    %91 = vector.broadcast %90 : vector<1x256xi1> to vector<8x256xi1>
    %92 = vector.broadcast %cst_31 : f32 to vector<8x256xf32>
    %93 = arith.select %91, %92, %89 : vector<8x256xi1>, vector<8x256xf32>
    %94 = arith.maximumf %88, %93 : vector<8x256xf32>
    %95 = arith.maximumf %83, %94 : vector<8x256xf32>
    %96 = tpu.concatenate %13, %47, %71, %95 in 0 : vector<8x256xf32>, vector<8x256xf32>, vector<8x256xf32>, vector<8x256xf32> -> vector<32x256xf32>
    %97 = arith.truncf %96 : vector<32x256xf32> to vector<32x256xbf16>
    %c0_32 = arith.constant 0 : index
    %c0_33 = arith.constant 0 : index
    %98 = vector.load %arg5[%c0_32, %c0_33] : memref<32x32xbf16, #tpu.memory_space<vmem>>, vector<32x32xbf16>
    %cst_34 = arith.constant dense<0.000000e+00> : vector<32x256xf32>
    %99 = tpu.matmul %98, %97, %cst_34 {dimension_numbers = #tpu.dot_dimension_numbers<[1], [0], [0], [1], [0, 0, 1, 1], [], []>} : vector<32x32xbf16>, vector<32x256xbf16>, vector<32x256xf32> -> vector<32x256xf32>
    %c0_35 = arith.constant 0 : index
    %c0_36 = arith.constant 0 : index
    %100 = vector.load %arg6[%c0_35, %c0_36] : memref<32x1xf32, #tpu.memory_space<vmem>>, vector<32x1xf32>
    %101 = vector.broadcast %100 : vector<32x1xf32> to vector<32x256xf32>
    %102 = arith.addf %99, %101 : vector<32x256xf32>
    %cst_37 = arith.constant 0.000000e+00 : f32
    %103 = vector.broadcast %cst_37 : f32 to vector<32x256xf32>
    %104 = arith.subf %103, %102 : vector<32x256xf32>
    %105 = math.exp %104 : vector<32x256xf32>
    %cst_38 = arith.constant 1.000000e+00 : f32
    %106 = vector.broadcast %cst_38 : f32 to vector<32x256xf32>
    %107 = arith.addf %106, %105 : vector<32x256xf32>
    %108 = tpu.reciprocal %107 {approx = true} : vector<32x256xf32> -> vector<32x256xf32>
    %109 = arith.mulf %102, %108 : vector<32x256xf32>
    %c0_39 = arith.constant 0 : index
    %c0_40 = arith.constant 0 : index
    %c0_41 = arith.constant 0 : index
    %110 = vector.load %arg7[%c0_39, %c0_40, %c0_41] : memref<1x32x256xf32, #tpu.memory_space<vmem>>, vector<1x32x256xf32>
    %111 = vector.shape_cast %110 : vector<1x32x256xf32> to vector<32x256xf32>
    %112 = vector.shape_cast %109 : vector<32x256xf32> to vector<1x32x256xf32>
    tpu.vector_store %arg7[%c0_39, %c0_40, %c0_41], %112 {strides = array<i32>} : memref<1x32x256xf32, #tpu.memory_space<vmem>>, vector<1x32x256xf32>,
    return
  }
  func.func @transform_0(%arg0: i32) -> (i32, i32) {
    %c0_i32 = arith.constant 0 : i32
    %c0_i32_0 = arith.constant 0 : i32
    %c0_i32_1 = arith.constant 0 : i32
    return %c0_i32, %c0_i32_0 : i32, i32
  }
  func.func @transform_1(%arg0: i32) -> (i32, i32, i32) {
    %c0_i32 = arith.constant 0 : i32
    %c0_i32_0 = arith.constant 0 : i32
    %c0_i32_1 = arith.constant 0 : i32
    return %arg0, %c0_i32, %c0_i32_0 : i32, i32, i32
  }
  func.func @transform_2(%arg0: i32) -> (i32, i32) {
    %c0_i32 = arith.constant 0 : i32
    %c0_i32_0 = arith.constant 0 : i32
    %c0_i32_1 = arith.constant 0 : i32
    return %c0_i32, %c0_i32_0 : i32, i32
  }
  func.func @transform_3(%arg0: i32) -> (i32, i32) {
    %c0_i32 = arith.constant 0 : i32
    %c0_i32_0 = arith.constant 0 : i32
    %c0_i32_1 = arith.constant 0 : i32
    return %c0_i32, %c0_i32_0 : i32, i32
  }
  func.func @transform_4(%arg0: i32) -> (i32, i32) {
    %c0_i32 = arith.constant 0 : i32
    %c0_i32_0 = arith.constant 0 : i32
    %c0_i32_1 = arith.constant 0 : i32
    return %c0_i32, %c0_i32_0 : i32, i32
  }
  func.func @transform_5(%arg0: i32) -> (i32, i32) {
    %c0_i32 = arith.constant 0 : i32
    %c0_i32_0 = arith.constant 0 : i32
    %c0_i32_1 = arith.constant 0 : i32
    return %c0_i32, %c0_i32_0 : i32, i32
  }
  func.func @transform_6(%arg0: i32) -> (i32, i32, i32) {
    %c0_i32 = arith.constant 0 : i32
    %c0_i32_0 = arith.constant 0 : i32
    %c0_i32_1 = arith.constant 0 : i32
    return %arg0, %c0_i32, %c0_i32_0 : i32, i32, i32
  }
}

</mosaic_0001>

<llo_original>
// kernel: spp_bottleneck_forward.1
$region0: #{spp_bottleneck_forward.1}
  #allocation0 [shape = 'u32[]', space=smem, size = 0x4, offset = 0x4, fixed_abs, tag = 'smem constant byte address 0x4 - core index']
  #allocation1 [shape = 'u32[144,128]{1,0:T(1,128)}', space=vmem, size = 0x12000, scoped, tag = 'internal scratch']
  %s0 = inlined_call_operand.vmem [shape: s32[1,256], index: 0, kind: input, shape index: {}]
  %s1 = inlined_call_operand.vmem [shape: bf16[2,16,256], index: 1, kind: input, shape index: {}]
  %s2 = inlined_call_operand.vmem [shape: bf16[8,16], index: 2, kind: input, shape index: {}]
  %s3 = inlined_call_operand.vmem [shape: f32[8,1], index: 3, kind: input, shape index: {}]
  %s4 = inlined_call_operand.vmem [shape: bf16[32,32], index: 4, kind: input, shape index: {}]
  %s5 = inlined_call_operand.vmem [shape: f32[32,1], index: 5, kind: input, shape index: {}]
  %s6 = inlined_call_operand.vmem [shape: f32[2,32,256], index: 6, kind: output, shape index: {}]
  %s7 = sld [smem:[#allocation0]]
  $region57: #{spp_bottleneck_forward.1} parent=0
    _
  %s9 = ssub.s32 1, %s7
  %s10 = scalar_select 0, %s9, %s7
  loop: start=0, step=1, limit=4
  $region2: #{spp_bottleneck_forward.1} parent=0 // loop_pre_header
    _
  $region3: #{spp_bottleneck_forward.1} parent=0 // loop_header
    %s12 = sphi 0, %s16
    %p13 = scmp.ge.s32.totalorder %s12, 4
    %s20 = sphi 0, %s20
    %s22 = sphi 0, %s20
    %s23 = sphi 0, %s22
    %s37 = sphi 0, %s23
    %s43 = sphi 0, %s45
    %s46 = sphi 0, %s43
    %s47 = sphi 0, %s46
    %s63 = sphi 0, %s47
    %s67 = sphi 0, %s67
    %s69 = sphi 0, %s67
    %s70 = sphi 0, %s69
    %s84 = sphi 0, %s70
    %s88 = sphi 0, %s88
    %s90 = sphi 0, %s88
    %s91 = sphi 0, %s90
    %s105 = sphi 0, %s91
    %s109 = sphi 0, %s109
    %s111 = sphi 0, %s109
    %s112 = sphi 0, %s111
    %s126 = sphi 0, %s112
    %s130 = sphi 0, %s130
    %s132 = sphi 0, %s130
    %s133 = sphi 0, %s132
    %s147 = sphi 0, %s133
    %s153 = sphi 0, %s155
    %s156 = sphi 0, %s153
    %s157 = sphi 0, %s156
    %s173 = sphi 0, %s157
  $region4: #{spp_bottleneck_forward.1} parent=0 // loop_header_branch
    %15 = sbr.rel (%p13) target = $region8
  $region5: #{spp_bottleneck_forward.1} parent=0 // loop_body
    %s17 = ssub.s32 %s12, 1
    %s18 = ssub.s32 %s12, 2
    %s19 = sadd.s32 %s12, 1
    %s21 = sadd.s32 %s20, 1
    %p24 = scmp.eq.s32.totalorder %s12, 1
    %p25 = scmp.ne.s32.totalorder %s20, %s22
    %p26 = scmp.eq.s32.totalorder %s12, 0
    %p27 = por %p25, %p26
    %p28 = scmp.ne.s32.totalorder %s20, %s22
    %p29 = scmp.eq.s32.totalorder %s17, 1
    %p30 = por %p28, %p29
    %p31 = scmp.ne.s32.totalorder %s22, %s23
    %p32 = scmp.eq.s32.totalorder %s17, 0
    %p33 = por %p31, %p32
    %p34 = scmp.ne.s32.totalorder %s22, %s23
    %p35 = scmp.eq.s32.totalorder %s18, 1
    %p36 = por %p34, %p35
    %p38 = scmp.ne.s32.totalorder %s23, %s37
    %p39 = scmp.eq.s32.totalorder %s18, 0
    %p40 = por %p38, %p39
    %s41 = ssub.s32 %s12, %s19
    %p42 = scmp.eq.s32.totalorder %s41, 0
    %s44 = sadd.s32 %s43, 1
    %s45 = scalar_select %p42, %s43, %s44
    %p48 = pneg %p42
    %p49 = scmp.eq.s32.totalorder %s12, 1
    %p50 = por %p48, %p49
    %p51 = scmp.ne.s32.totalorder %s43, %s46
    %p52 = scmp.eq.s32.totalorder %s12, 0
    %p53 = por %p51, %p52
    %p54 = scmp.ne.s32.totalorder %s43, %s46
    %p55 = scmp.eq.s32.totalorder %s17, 1
    %p56 = por %p54, %p55
    %p57 = scmp.ne.s32.totalorder %s46, %s47
    %p58 = scmp.eq.s32.totalorder %s17, 0
    %p59 = por %p57, %p58
    %p60 = scmp.ne.s32.totalorder %s46, %s47
    %p61 = scmp.eq.s32.totalorder %s18, 1
    %p62 = por %p60, %p61
    %p64 = scmp.ne.s32.totalorder %s47, %s63
    %p65 = scmp.eq.s32.totalorder %s18, 0
    %p66 = por %p64, %p65
    %s68 = sadd.s32 %s67, 1
    %p71 = scmp.eq.s32.totalorder %s12, 1
    %p72 = scmp.ne.s32.totalorder %s67, %s69
    %p73 = scmp.eq.s32.totalorder %s12, 0
    %p74 = por %p72, %p73
    %p75 = scmp.ne.s32.totalorder %s67, %s69
    %p76 = scmp.eq.s32.totalorder %s17, 1
    %p77 = por %p75, %p76
    %p78 = scmp.ne.s32.totalorder %s69, %s70
    %p79 = scmp.eq.s32.totalorder %s17, 0
    %p80 = por %p78, %p79
    %p81 = scmp.ne.s32.totalorder %s69, %s70
    %p82 = scmp.eq.s32.totalorder %s18, 1
    %p83 = por %p81, %p82
    %p85 = scmp.ne.s32.totalorder %s70, %s84
    %p86 = scmp.eq.s32.totalorder %s18, 0
    %p87 = por %p85, %p86
    %s89 = sadd.s32 %s88, 1
    %p92 = scmp.eq.s32.totalorder %s12, 1
    %p93 = scmp.ne.s32.totalorder %s88, %s90
    %p94 = scmp.eq.s32.totalorder %s12, 0
    %p95 = por %p93, %p94
    %p96 = scmp.ne.s32.totalorder %s88, %s90
    %p97 = scmp.eq.s32.totalorder %s17, 1
    %p98 = por %p96, %p97
    %p99 = scmp.ne.s32.totalorder %s90, %s91
    %p100 = scmp.eq.s32.totalorder %s17, 0
    %p101 = por %p99, %p100
    %p102 = scmp.ne.s32.totalorder %s90, %s91
    %p103 = scmp.eq.s32.totalorder %s18, 1
    %p104 = por %p102, %p103
    %p106 = scmp.ne.s32.totalorder %s91, %s105
    %p107 = scmp.eq.s32.totalorder %s18, 0
    %p108 = por %p106, %p107
    %s110 = sadd.s32 %s109, 1
    %p113 = scmp.eq.s32.totalorder %s12, 1
    %p114 = scmp.ne.s32.totalorder %s109, %s111
    %p115 = scmp.eq.s32.totalorder %s12, 0
    %p116 = por %p114, %p115
    %p117 = scmp.ne.s32.totalorder %s109, %s111
    %p118 = scmp.eq.s32.totalorder %s17, 1
    %p119 = por %p117, %p118
    %p120 = scmp.ne.s32.totalorder %s111, %s112
    %p121 = scmp.eq.s32.totalorder %s17, 0
    %p122 = por %p120, %p121
    %p123 = scmp.ne.s32.totalorder %s111, %s112
    %p124 = scmp.eq.s32.totalorder %s18, 1
    %p125 = por %p123, %p124
    %p127 = scmp.ne.s32.totalorder %s112, %s126
    %p128 = scmp.eq.s32.totalorder %s18, 0
    %p129 = por %p127, %p128
    %s131 = sadd.s32 %s130, 1
    %p134 = scmp.eq.s32.totalorder %s12, 1
    %p135 = scmp.ne.s32.totalorder %s130, %s132
    %p136 = scmp.eq.s32.totalorder %s12, 0
    %p137 = por %p135, %p136
    %p138 = scmp.ne.s32.totalorder %s130, %s132
    %p139 = scmp.eq.s32.totalorder %s17, 1
    %p140 = por %p138, %p139
    %p141 = scmp.ne.s32.totalorder %s132, %s133
    %p142 = scmp.eq.s32.totalorder %s17, 0
    %p143 = por %p141, %p142
    %p144 = scmp.ne.s32.totalorder %s132, %s133
    %p145 = scmp.eq.s32.totalorder %s18, 1
    %p146 = por %p144, %p145
    %p148 = scmp.ne.s32.totalorder %s133, %s147
    %p149 = scmp.eq.s32.totalorder %s18, 0
    %p150 = por %p148, %p149
    %s151 = ssub.s32 %s12, %s19
    %p152 = scmp.eq.s32.totalorder %s151, 0
    %s154 = sadd.s32 %s153, 1
    %s155 = scalar_select %p152, %s153, %s154
    %p158 = pneg %p152
    %p159 = scmp.eq.s32.totalorder %s12, 1
    %p160 = por %p158, %p159
    %p161 = scmp.ne.s32.totalorder %s153, %s156
    %p162 = scmp.eq.s32.totalorder %s12, 0
    %p163 = por %p161, %p162
    %p164 = scmp.ne.s32.totalorder %s153, %s156
    %p165 = scmp.eq.s32.totalorder %s17, 1
    %p166 = por %p164, %p165
    %p167 = scmp.ne.s32.totalorder %s156, %s157
    %p168 = scmp.eq.s32.totalorder %s17, 0
    %p169 = por %p167, %p168
    %p170 = scmp.ne.s32.totalorder %s156, %s157
    %p171 = scmp.eq.s32.totalorder %s18, 1
    %p172 = por %p170, %p171
    %p174 = scmp.ne.s32.totalorder %s157, %s173
    %p175 = scmp.eq.s32.totalorder %s18, 0
    %p176 = por %p174, %p175
    %p177 = scmp.le.s32.totalorder 1, %s12
    %p178 = scmp.lt.s32.totalorder %s12, 3
    %p179 = pnand %p177, %p178
    %p180 = pneg %p179
    // Predicated region
    $region9: #{spp_bottleneck_forward.1} parent=5 // pred_check
      _
    $region10: #{spp_bottleneck_forward.1} parent=5 // pred_check_branch
      %182 = sbr.rel (%p179) target = $region12
    $region11: #{spp_bottleneck_forward.1} parent=5 // pred_region
      %s183 = ssub.s32 %s12, 1
      // Predicated region
      $region13: #{spp_bottleneck_forward.1} parent=11 // pred_check
        %p184 = pneg %p33
      $region14: #{spp_bottleneck_forward.1} parent=11 // pred_check_branch
        %186 = sbr.rel (%p184) target = $region16
      $region15: #{spp_bottleneck_forward.1} parent=11 // pred_region
        _
      $region16: #{spp_bottleneck_forward.1} parent=11 // pred_fallthru
        _
      // Predicated region
      $region17: #{spp_bottleneck_forward.1} parent=11 // pred_check
        %p187 = pneg %p80
      $region18: #{spp_bottleneck_forward.1} parent=11 // pred_check_branch
        %189 = sbr.rel (%p187) target = $region20
      $region19: #{spp_bottleneck_forward.1} parent=11 // pred_region
        _
      $region20: #{spp_bottleneck_forward.1} parent=11 // pred_fallthru
        _
      // Predicated region
      $region21: #{spp_bottleneck_forward.1} parent=11 // pred_check
        %p190 = pneg %p101
      $region22: #{spp_bottleneck_forward.1} parent=11 // pred_check_branch
        %192 = sbr.rel (%p190) target = $region24
      $region23: #{spp_bottleneck_forward.1} parent=11 // pred_region
        _
      $region24: #{spp_bottleneck_forward.1} parent=11 // pred_fallthru
        _
      // Predicated region
      $region25: #{spp_bottleneck_forward.1} parent=11 // pred_check
        %p193 = pneg %p122
      $region26: #{spp_bottleneck_forward.1} parent=11 // pred_check_branch
        %195 = sbr.rel (%p193) target = $region28
      $region27: #{spp_bottleneck_forward.1} parent=11 // pred_region
        _
      $region28: #{spp_bottleneck_forward.1} parent=11 // pred_fallthru
        _
      // Predicated region
      $region29: #{spp_bottleneck_forward.1} parent=11 // pred_check
        %p196 = pneg %p143
      $region30: #{spp_bottleneck_forward.1} parent=11 // pred_check_branch
        %198 = sbr.rel (%p196) target = $region32
      $region31: #{spp_bottleneck_forward.1} parent=11 // pred_region
        _
      $region32: #{spp_bottleneck_forward.1} parent=11 // pred_fallthru
        _
    $region12: #{spp_bottleneck_forward.1} parent=5 // pred_fallthru
      _
    %p199 = scmp.lt.s32.totalorder %s12, 2
    // Predicated region
    $region33: #{spp_bottleneck_forward.1} parent=5 // pred_check
      %p200 = pneg %p199
    $region34: #{spp_bottleneck_forward.1} parent=5 // pred_check_branch
      %202 = sbr.rel (%p200) target = $region36
    $region35: #{spp_bottleneck_forward.1} parent=5 // pred_region
      // Predicated region
      $region37: #{spp_bottleneck_forward.1} parent=35 // pred_check
        %p203 = pneg %p53
      $region38: #{spp_bottleneck_forward.1} parent=35 // pred_check_branch
        %205 = sbr.rel (%p203) target = $region40
      $region39: #{spp_bottleneck_forward.1} parent=35 // pred_region
        %p206 = scmp.lt.s32.totalorder %s12, 1
        %s207 = scalar_select %p206, %s12, 1
        %s208 = smul.addr %s207, 4
        %s209 = smul.addr %s208, 4
        %s210 = scalar_lea.vmem %s1, %s209
      $region40: #{spp_bottleneck_forward.1} parent=35 // pred_fallthru
        _
    $region36: #{spp_bottleneck_forward.1} parent=5 // pred_fallthru
      _
    %p211 = scmp.le.s32.totalorder 1, %s12
    %p212 = scmp.lt.s32.totalorder %s12, 3
    %p213 = pnand %p211, %p212
    %p214 = pneg %p213
    // Predicated region
    $region41: #{spp_bottleneck_forward.1} parent=5 // pred_check
      _
    $region42: #{spp_bottleneck_forward.1} parent=5 // pred_check_branch
      %216 = sbr.rel (%p213) target = $region44
    $region43: #{spp_bottleneck_forward.1} parent=5 // pred_region
      %s217 = ssub.s32 %s12, 1
      %p218 = pneg %p33
      %p219 = pneg %p30
      %p220 = scmp.lt.s32.totalorder %s17, 1
      %s221 = scalar_select %p220, %s17, 1
      %s222 = smul.addr %s221, 4
      %s223 = smul.addr %s222, 4
      %s224 = scalar_lea.vmem %s1, %s223
      %p225 = pneg %p59
      %p226 = pneg %p56
      %p227 = pneg %p80
      %p228 = pneg %p77
      %p229 = pneg %p101
      %p230 = pneg %p98
      %p231 = pneg %p122
      %p232 = pneg %p119
      %p233 = pneg %p143
      %p234 = pneg %p140
      %p235 = pneg %p169
      %p236 = pneg %p166
      %p237 = scmp.lt.s32.totalorder %s17, 1
      %s238 = scalar_select %p237, %s17, 1
      %s239 = smul.addr %s238, 8
      %s240 = smul.addr %s239, 8
      %s241 = scalar_lea.vmem %s6, %s240
      %p242 = scmp.lt.s32.totalorder %s17, 1
      %s243 = scalar_select %p242, %s17, 1
      %s244 = smul.addr %s243, 4
      %s245 = smul.addr %s244, 4
      %s246 = scalar_lea.vmem %s1, %s245
      %p247 = scmp.lt.s32.totalorder %s17, 1
      %s248 = scalar_select %p247, %s17, 1
      %s249 = smul.addr %s248, 8
      %s250 = smul.addr %s249, 8
      %s251 = scalar_lea.vmem %s6, %s250
      %v253 = vld [vmem:[%s246] sm:$0xff]
      %v254 = vld [vmem:[%s246 + $0x8] sm:$0xff]
      %v255 = vld [vmem:[%s2] sm:$0xf]
      %v256 = vld [vmem:[%s3] sm:$0xff]
      %258 = vset.pattern.permute.xlu0 0
      %259 = vperm.xlu0 %258, %v256
      %v260 = vpop.permute.xlu0 %259
      %v264 = vunpack.c.l.b16 %v253
      %v265 = vunpack.c.h.b16 %v253
      %v266 = vunpack.c.l.b16 %v254
      %v267 = vunpack.c.h.b16 %v254
      %v268 = vpack.c.b16 %v266, %v264
      %v269 = vpack.c.b16 %v267, %v265
      %vm272 = vcmask 130048
      %v274 = vsel %vm272, %v255, 0
      %276 = vmatprep.subr.bf16.mxu0 %v269
      %277 = vmatpush1.bf16.msra.mxu0 %v268
      %278 = vmatprep.subr.bf16.mxu0 0
      %279 = vmatpush1.bf16.msra.mxu0 0
      %280 = vmatprep.subr.bf16.mxu0 0
      %281 = vmatpush1.bf16.msra.mxu0 0
      %282 = vmatprep.subr.bf16.mxu0 0
      %283 = vmatpush1.bf16.msra.mxu0 0
      %284 = vmatprep.subr.bf16.mxu0 0
      %285 = vmatpush1.bf16.msra.mxu0 0
      %286 = vmatprep.subr.bf16.mxu0 0
      %287 = vmatpush1.bf16.msra.mxu0 0
      %288 = vmatprep.subr.bf16.mxu0 0
      %289 = vmatpush1.bf16.msra.mxu0 0
      %290 = vmatprep.subr.bf16.mxu0 0
      %291 = vmatpush1.bf16.msra.mxu0 0
      %292 = vmatprep.subr.bf16.mxu0 0
      %293 = vmatpush1.bf16.msra.mxu0 0
      %294 = vmatprep.subr.bf16.mxu0 0
      %295 = vmatpush1.bf16.msra.mxu0 0
      %296 = vmatprep.subr.bf16.mxu0 0
      %297 = vmatpush1.bf16.msra.mxu0 0
      %298 = vmatprep.subr.bf16.mxu0 0
      %299 = vmatpush1.bf16.msra.mxu0 0
      %300 = vmatprep.subr.bf16.mxu0 0
      %301 = vmatpush1.bf16.msra.mxu0 0
      %302 = vmatprep.subr.bf16.mxu0 0
      %303 = vmatpush1.bf16.msra.mxu0 0
      %304 = vmatprep.subr.bf16.mxu0 0
      %305 = vmatpush1.bf16.msra.mxu0 0
      %306 = vmatprep.subr.bf16.mxu0 0
      %307 = vmatpush1.bf16.msra.mxu0 0
      %308 = vmatprep.mubr.bf16.mxu0 0
      %309 = vmatmul.mubr.bf16.gmra.mrb[0].mxu0 %v274
      %v310 = vpop.f32.mrb[0].mxu0
      %v311 = vadd.f32 %v260, %v310
      %v312 = vpop.f32.mrb[0].mxu0
      %v313 = vadd.f32 %v260, %v312
      %v314 = vpop.f32.mrb[0].mxu0
      %v315 = vpop.f32.mrb[0].mxu0
      %316 = vdwg.mxu0
      %v317 = vsub.f32 0.0, %v311
      %v318 = vsub.f32 0.0, %v313
      %v319 = vmul.f32 %v317, 1.442695
      %v320 = vpow.pop %v319
      %v321 = vmul.f32 %v318, 1.442695
      %v322 = vpow.pop %v321
      %v323 = vadd.f32 %v320, 1.0
      %v324 = vadd.f32 %v322, 1.0
      %v325 = vrcp.pop %v323
      %v326 = vrcp.pop %v324
      %v327 = vmul.f32 %v311, %v325
      %v328 = vmul.f32 %v313, %v326
      %v329 = vld [vmem:[%s0] sm:$0x3]
      %v330 = vlaneseq
      %v331 = vand.u32 %v330, 127
      %v332 = vadd.s32 %v331, 128
      %vm333 = vcmp.eq.s32.totalorder %v329, 0
      %vm334 = vcmp.eq.s32.totalorder %v329, 15
      %vm335 = vcmp.lt.s32.totalorder %v331, 16
      %vm336 = vcmp.lt.s32.totalorder %v332, 16
      %vm337 = vcmp.ge.s32.totalorder %v331, 240
      %vm338 = vcmp.ge.s32.totalorder %v332, 240
      %339 = vrot.lane.b32.xlu0 %v327, 127
      %v340 = vpop.permute.xlu0 %339
      %341 = vrot.lane.b32.xlu0 %v328, 127
      %v342 = vpop.permute.xlu0 %341
      %vm343 = vcmp.lt.s32.totalorder %v331, 127
      %v344 = vsel %vm343, %v340, %v342
      %v345 = vsel %vm343, %v342, %v340
      %v346 = vsel %vm334, 1, 0
      %v347 = vlaneseq
      %v348 = vshrl.u32 %v347, 7
      %v349 = vsub.s32 0, %v348
      %v350 = vrot.slane %v346, %v349
      %v351 = vlaneseq
      %v352 = vshrl.u32 %v351, 7
      %v353 = vsub.s32 1, %v352
      %v354 = vrot.slane %v346, %v353
      %vm355 = vcmp.eq.s32.totalorder %v350, 1
      %vm356 = vcmp.eq.s32.totalorder %v354, 1
      %v357 = vsel %vm355, -inf, %v344
      %v358 = vsel %vm356, -inf, %v345
      %359 = vrot.lane.b32.xlu0 %v327, 1
      %v360 = vpop.permute.xlu0 %359
      %361 = vrot.lane.b32.xlu0 %v328, 1
      %v362 = vpop.permute.xlu0 %361
      %vm363 = vcmp.lt.s32.totalorder %v331, 1
      %v364 = vsel %vm363, %v360, %v362
      %v365 = vsel %vm363, %v362, %v360
      %v366 = vsel %vm333, 1, 0
      %v367 = vlaneseq
      %v368 = vshrl.u32 %v367, 7
      %v369 = vsub.s32 0, %v368
      %v370 = vrot.slane %v366, %v369
      %v371 = vlaneseq
      %v372 = vshrl.u32 %v371, 7
      %v373 = vsub.s32 1, %v372
      %v374 = vrot.slane %v366, %v373
      %vm375 = vcmp.eq.s32.totalorder %v370, 1
      %vm376 = vcmp.eq.s32.totalorder %v374, 1
      %v377 = vsel %vm375, -inf, %v365
      %v378 = vsel %vm376, -inf, %v364
      %v379 = vmax.f32 %v357, %v377
      %v380 = vmax.f32 %v358, %v378
      %v381 = vmax.f32 %v327, %v379
      %v382 = vmax.f32 %v328, %v380
      %383 = vrot.lane.b32.xlu0 %v381, 112
      %v384 = vpop.permute.xlu0 %383
      %385 = vrot.lane.b32.xlu0 %v382, 112
      %v386 = vpop.permute.xlu0 %385
      %vm387 = vcmp.lt.s32.totalorder %v331, 112
      %v388 = vsel %vm387, %v384, %v386
      %v389 = vsel %vm387, %v386, %v384
      %v390 = vsel %vm337, 1, 0
      %v391 = vsel %vm338, 1, 0
      %vm392 = vcmp.eq.s32.totalorder %v390, 1
      %vm393 = vcmp.eq.s32.totalorder %v391, 1
      %v394 = vsel %vm392, -inf, %v388
      %v395 = vsel %vm393, -inf, %v389
      %396 = vrot.lane.b32.xlu0 %v381, 16
      %v397 = vpop.permute.xlu0 %396
      %398 = vrot.lane.b32.xlu0 %v382, 16
      %v399 = vpop.permute.xlu0 %398
      %v400 = vsel %vm335, %v397, %v399
      %v401 = vsel %vm335, %v399, %v397
      %v402 = vsel %vm335, 1, 0
      %v403 = vsel %vm336, 1, 0
      %vm404 = vcmp.eq.s32.totalorder %v402, 1
      %vm405 = vcmp.eq.s32.totalorder %v403, 1
      %v406 = vsel %vm404, -inf, %v401
      %v407 = vsel %vm405, -inf, %v400
      %v408 = vmax.f32 %v394, %v406
      %v409 = vmax.f32 %v395, %v407
      %v410 = vmax.f32 %v381, %v408
      %v411 = vmax.f32 %v382, %v409
      %412 = vrot.lane.b32.xlu0 %v410, 127
      %v413 = vpop.permute.xlu0 %412
      %414 = vrot.lane.b32.xlu0 %v411, 127
      %v415 = vpop.permute.xlu0 %414
      %v416 = vsel %vm343, %v413, %v415
      %v417 = vsel %vm343, %v415, %v413
      %v418 = vsel %vm355, -inf, %v416
      %v419 = vsel %vm356, -inf, %v417
      %420 = vrot.lane.b32.xlu0 %v410, 1
      %v421 = vpop.permute.xlu0 %420
      %422 = vrot.lane.b32.xlu0 %v411, 1
      %v423 = vpop.permute.xlu0 %422
      %v424 = vsel %vm363, %v421, %v423
      %v425 = vsel %vm363, %v423, %v421
      %v426 = vsel %vm375, -inf, %v425
      %v427 = vsel %vm376, -inf, %v424
      %v428 = vmax.f32 %v418, %v426
      %v429 = vmax.f32 %v419, %v427
      %v430 = vmax.f32 %v410, %v428
      %v431 = vmax.f32 %v411, %v429
      %432 = vrot.lane.b32.xlu0 %v430, 112
      %v433 = vpop.permute.xlu0 %432
      %434 = vrot.lane.b32.xlu0 %v431, 112
      %v435 = vpop.permute.xlu0 %434
      %v436 = vsel %vm387, %v433, %v435
      %v437 = vsel %vm387, %v435, %v433
      %v438 = vsel %vm392, -inf, %v436
      %v439 = vsel %vm393, -inf, %v437
      %440 = vrot.lane.b32.xlu0 %v430, 16
      %v441 = vpop.permute.xlu0 %440
      %442 = vrot.lane.b32.xlu0 %v431, 16
      %v443 = vpop.permute.xlu0 %442
      %v444 = vsel %vm335, %v441, %v443
      %v445 = vsel %vm335, %v443, %v441
      %v446 = vsel %vm404, -inf, %v445
      %v447 = vsel %vm405, -inf, %v444
      %v448 = vmax.f32 %v438, %v446
      %v449 = vmax.f32 %v439, %v447
      %v450 = vmax.f32 %v430, %v448
      %v451 = vmax.f32 %v431, %v449
      %452 = vrot.lane.b32.xlu0 %v450, 127
      %v453 = vpop.permute.xlu0 %452
      %454 = vrot.lane.b32.xlu0 %v451, 127
      %v455 = vpop.permute.xlu0 %454
      %v456 = vsel %vm343, %v453, %v455
      %v457 = vsel %vm343, %v455, %v453
      %v458 = vsel %vm355, -inf, %v456
      %v459 = vsel %vm356, -inf, %v457
      %460 = vrot.lane.b32.xlu0 %v450, 1
      %v461 = vpop.permute.xlu0 %460
      %462 = vrot.lane.b32.xlu0 %v451, 1
      %v463 = vpop.permute.xlu0 %462
      %v464 = vsel %vm363, %v461, %v463
      %v465 = vsel %vm363, %v463, %v461
      %v466 = vsel %vm375, -inf, %v465
      %v467 = vsel %vm376, -inf, %v464
      %v468 = vmax.f32 %v458, %v466
      %v469 = vmax.f32 %v459, %v467
      %v470 = vmax.f32 %v450, %v468
      %v471 = vmax.f32 %v451, %v469
      %472 = vrot.lane.b32.xlu0 %v470, 112
      %v473 = vpop.permute.xlu0 %472
      %474 = vrot.lane.b32.xlu0 %v471, 112
      %v475 = vpop.permute.xlu0 %474
      %v476 = vsel %vm387, %v473, %v475
      %v477 = vsel %vm387, %v475, %v473
      %v478 = vsel %vm392, -inf, %v476
      %v479 = vsel %vm393, -inf, %v477
      %480 = vrot.lane.b32.xlu0 %v470, 16
      %v481 = vpop.permute.xlu0 %480
      %482 = vrot.lane.b32.xlu0 %v471, 16
      %v483 = vpop.permute.xlu0 %482
      %v484 = vsel %vm335, %v481, %v483
      %v485 = vsel %vm335, %v483, %v481
      %v486 = vsel %vm404, -inf, %v485
      %v487 = vsel %vm405, -inf, %v484
      %v488 = vmax.f32 %v478, %v486
      %v489 = vmax.f32 %v479, %v487
      %v490 = vmax.f32 %v470, %v488
      %v491 = vmax.f32 %v471, %v489
      %v492 = vpack.c.bf16 %v410, %v327
      %v493 = vpack.c.bf16 %v411, %v328
      %v494 = vpack.c.bf16 %v490, %v450
      %v495 = vpack.c.bf16 %v491, %v451
      %v496 = vld [vmem:[%s4] sm:$0xf]
      %v497 = vld [vmem:[%s4 + $0x4] sm:$0xf]
      %v498 = vld [vmem:[%s4 + $0x8] sm:$0xf]
      %v499 = vld [vmem:[%s4 + $0xc] sm:$0xf]
      %v500 = vld [vmem:[%s5] sm:$0xff]
      %v501 = vld [vmem:[%s5 + $0x8] sm:$0xff]
      %v502 = vld [vmem:[%s5 + $0x10] sm:$0xff]
      %v503 = vld [vmem:[%s5 + $0x18] sm:$0xff]
      %505 = vset.pattern.permute.xlu0 0
      %506 = vperm.xlu0 %505, %v500
      %v507 = vpop.permute.xlu0 %506
      %510 = vset.pattern.permute.xlu0 0
      %511 = vperm.xlu0 %510, %v501
      %v512 = vpop.permute.xlu0 %511
      %515 = vset.pattern.permute.xlu0 0
      %516 = vperm.xlu0 %515, %v502
      %v517 = vpop.permute.xlu0 %516
      %520 = vset.pattern.permute.xlu0 0
      %521 = vperm.xlu0 %520, %v503
      %v522 = vpop.permute.xlu0 %521
      %v528 = vunpack.c.l.b16 %v496
      %v529 = vunpack.c.l.b16 %v497
      %v530 = vunpack.c.l.b16 %v498
      %v531 = vunpack.c.l.b16 %v499
      %v532 = vpack.c.b16 %v529, %v528
      %v533 = vpack.c.b16 %v531, %v530
      %vm534 = vcmask 261120
      %v536 = vsel %vm534, %v532, 0
      %v539 = vsel %vm534, %v533, 0
      %541 = vmatprep.subr.bf16.mxu0 %v493
      %542 = vmatpush1.bf16.msra.mxu0 %v492
      %543 = vmatprep.subr.bf16.mxu0 %v495
      %544 = vmatpush1.bf16.msra.mxu0 %v494
      %545 = vmatprep.subr.bf16.mxu0 0
      %546 = vmatpush1.bf16.msra.mxu0 0
      %547 = vmatprep.subr.bf16.mxu0 0
      %548 = vmatpush1.bf16.msra.mxu0 0
      %549 = vmatprep.subr.bf16.mxu0 0
      %550 = vmatpush1.bf16.msra.mxu0 0
      %551 = vmatprep.subr.bf16.mxu0 0
      %552 = vmatpush1.bf16.msra.mxu0 0
      %553 = vmatprep.subr.bf16.mxu0 0
      %554 = vmatpush1.bf16.msra.mxu0 0
      %555 = vmatprep.subr.bf16.mxu0 0
      %556 = vmatpush1.bf16.msra.mxu0 0
      %557 = vmatprep.subr.bf16.mxu0 0
      %558 = vmatpush1.bf16.msra.mxu0 0
      %559 = vmatprep.subr.bf16.mxu0 0
      %560 = vmatpush1.bf16.msra.mxu0 0
      %561 = vmatprep.subr.bf16.mxu0 0
      %562 = vmatpush1.bf16.msra.mxu0 0
      %563 = vmatprep.subr.bf16.mxu0 0
      %564 = vmatpush1.bf16.msra.mxu0 0
      %565 = vmatprep.subr.bf16.mxu0 0
      %566 = vmatpush1.bf16.msra.mxu0 0
      %567 = vmatprep.subr.bf16.mxu0 0
      %568 = vmatpush1.bf16.msra.mxu0 0
      %569 = vmatprep.subr.bf16.mxu0 0
      %570 = vmatpush1.bf16.msra.mxu0 0
      %571 = vmatprep.subr.bf16.mxu0 0
      %572 = vmatpush1.bf16.msra.mxu0 0
      %573 = vmatprep.mubr.bf16.mxu0 0
      %574 = vmatmul.mubr.bf16.gmra.mrb[0].mxu0 %v536
      %v575 = vpop.f32.mrb[0].mxu0
      %v576 = vadd.f32 %v507, %v575
      %v577 = vpop.f32.mrb[0].mxu0
      %v578 = vadd.f32 %v507, %v577
      %v579 = vpop.f32.mrb[0].mxu0
      %v580 = vadd.f32 %v512, %v579
      %v581 = vpop.f32.mrb[0].mxu0
      %v582 = vadd.f32 %v512, %v581
      %583 = vmatprep.mubr.bf16.mxu0 0
      %584 = vmatmul.mubr.bf16.gmra.mrb[0].mxu0 %v539
      %v585 = vpop.f32.mrb[0].mxu0
      %v586 = vadd.f32 %v517, %v585
      %v587 = vpop.f32.mrb[0].mxu0
      %v588 = vadd.f32 %v517, %v587
      %v589 = vpop.f32.mrb[0].mxu0
      %v590 = vadd.f32 %v522, %v589
      %v591 = vpop.f32.mrb[0].mxu0
      %v592 = vadd.f32 %v522, %v591
      %593 = vdwg.mxu0
      %v594 = vsub.f32 0.0, %v576
      %v595 = vsub.f32 0.0, %v578
      %v596 = vsub.f32 0.0, %v580
      %v597 = vsub.f32 0.0, %v582
      %v598 = vsub.f32 0.0, %v586
      %v599 = vsub.f32 0.0, %v588
      %v600 = vsub.f32 0.0, %v590
      %v601 = vsub.f32 0.0, %v592
      %v602 = vmul.f32 %v594, 1.442695
      %v603 = vpow.pop %v602
      %v604 = vmul.f32 %v595, 1.442695
      %v605 = vpow.pop %v604
      %v606 = vmul.f32 %v596, 1.442695
      %v607 = vpow.pop %v606
      %v608 = vmul.f32 %v597, 1.442695
      %v609 = vpow.pop %v608
      %v610 = vmul.f32 %v598, 1.442695
      %v611 = vpow.pop %v610
      %v612 = vmul.f32 %v599, 1.442695
      %v613 = vpow.pop %v612
      %v614 = vmul.f32 %v600, 1.442695
      %v615 = vpow.pop %v614
      %v616 = vmul.f32 %v601, 1.442695
      %v617 = vpow.pop %v616
      %v618 = vadd.f32 %v603, 1.0
      %v619 = vadd.f32 %v605, 1.0
      %v620 = vadd.f32 %v607, 1.0
      %v621 = vadd.f32 %v609, 1.0
      %v622 = vadd.f32 %v611, 1.0
      %v623 = vadd.f32 %v613, 1.0
      %v624 = vadd.f32 %v615, 1.0
      %v625 = vadd.f32 %v617, 1.0
      %v626 = vrcp.pop %v618
      %v627 = vrcp.pop %v619
      %v628 = vrcp.pop %v620
      %v629 = vrcp.pop %v621
      %v630 = vrcp.pop %v622
      %v631 = vrcp.pop %v623
      %v632 = vrcp.pop %v624
      %v633 = vrcp.pop %v625
      %v634 = vmul.f32 %v576, %v626
      %v635 = vmul.f32 %v578, %v627
      %v636 = vmul.f32 %v580, %v628
      %v637 = vmul.f32 %v582, %v629
      %v638 = vmul.f32 %v586, %v630
      %v639 = vmul.f32 %v588, %v631
      %v640 = vmul.f32 %v590, %v632
      %v641 = vmul.f32 %v592, %v633
      %642 = vst [vmem:[%s251] sm:$0xff] %v634
      %643 = vst [vmem:[%s251 + $0x8] sm:$0xff] %v635
      %644 = vst [vmem:[%s251 + $0x10] sm:$0xff] %v636
      %645 = vst [vmem:[%s251 + $0x18] sm:$0xff] %v637
      %646 = vst [vmem:[%s251 + $0x20] sm:$0xff] %v638
      %647 = vst [vmem:[%s251 + $0x28] sm:$0xff] %v639
      %648 = vst [vmem:[%s251 + $0x30] sm:$0xff] %v640
      %649 = vst [vmem:[%s251 + $0x38] sm:$0xff] %v641
      %p650 = scmp.lt.s32.totalorder %s17, 1
      %s651 = scalar_select %p650, %s17, 1
      %s652 = smul.addr %s651, 8
      %s653 = smul.addr %s652, 8
      %s654 = scalar_lea.vmem %s6, %s653
      // Predicated region
      $region45: #{spp_bottleneck_forward.1} parent=43 // pred_check
        %p655 = pneg %p166
      $region46: #{spp_bottleneck_forward.1} parent=43 // pred_check_branch
        %657 = sbr.rel (%p655) target = $region48
      $region47: #{spp_bottleneck_forward.1} parent=43 // pred_region
        _
      $region48: #{spp_bottleneck_forward.1} parent=43 // pred_fallthru
        _
    $region44: #{spp_bottleneck_forward.1} parent=5 // pred_fallthru
      _
    %p658 = scmp.le.s32.totalorder 2, %s12
    // Predicated region
    $region49: #{spp_bottleneck_forward.1} parent=5 // pred_check
      %p659 = pneg %p658
    $region50: #{spp_bottleneck_forward.1} parent=5 // pred_check_branch
      %661 = sbr.rel (%p659) target = $region52
    $region51: #{spp_bottleneck_forward.1} parent=5 // pred_region
      %s662 = ssub.s32 %s12, 2
      // Predicated region
      $region53: #{spp_bottleneck_forward.1} parent=51 // pred_check
        %p663 = pneg %p172
      $region54: #{spp_bottleneck_forward.1} parent=51 // pred_check_branch
        %665 = sbr.rel (%p663) target = $region56
      $region55: #{spp_bottleneck_forward.1} parent=51 // pred_region
        %p666 = scmp.lt.s32.totalorder %s18, 1
        %s667 = scalar_select %p666, %s18, 1
        %s668 = smul.addr %s667, 8
        %s669 = smul.addr %s668, 8
        %s670 = scalar_lea.vmem %s6, %s669
      $region56: #{spp_bottleneck_forward.1} parent=51 // pred_fallthru
        _
    $region52: #{spp_bottleneck_forward.1} parent=5 // pred_fallthru
      _
  $region6: #{spp_bottleneck_forward.1} parent=0 // loop_footer
    %s16 = sadd.s32 1, %s12
  $region7: #{spp_bottleneck_forward.1} parent=0 // loop_footer_branch
    %11 = sbr.rel target = $region3
  $region8: #{spp_bottleneck_forward.1} parent=0 // loop_exit
    _

// kernel: spp_bottleneck_forward.1
$region0: #{spp_bottleneck_forward.1}
  #allocation0 [shape = 'u32[]', space=smem, size = 0x4, offset = 0x4, fixed_abs, tag = 'smem constant byte address 0x4 - core index']
  #allocation1 [shape = 'u32[144,128]{1,0:T(1,128)}', space=vmem, size = 0x12000, scoped, tag = 'internal scratch']
  %s0 = inlined_call_operand.vmem [shape: s32[1,256], index: 0, kind: input, shape index: {}]
  %s1 = inlined_call_operand.vmem [shape: bf16[2,16,256], index: 1, kind: input, shape index: {}]
  %s2 = inlined_call_operand.vmem [shape: bf16[8,16], index: 2, kind: input, shape index: {}]
  %s3 = inlined_call_operand.vmem [shape: f32[8,1], index: 3, kind: input, shape index: {}]
  %s4 = inlined_call_operand.vmem [shape: bf16[32,32], index: 4, kind: input, shape index: {}]
  %s5 = inlined_call_operand.vmem [shape: f32[32,1], index: 5, kind: input, shape index: {}]
  %s6 = inlined_call_operand.vmem [shape: f32[2,32,256], index: 6, kind: output, shape index: {}]
  %s7 = sld [smem:[#allocation0]]
  $region57: #{spp_bottleneck_forward.1} parent=0
    _
  %s9 = ssub.s32 1, %s7
  %s10 = scalar_select 0, %s9, %s7
  loop: start=0, step=1, limit=4
  $region2: #{spp_bottleneck_forward.1} parent=0 // loop_pre_header
    _
  $region3: #{spp_bottleneck_forward.1} parent=0 // loop_header
    %s12 = sphi 0, %s16
    %p13 = scmp.ge.s32.totalorder %s12, 4
    %s20 = sphi 0, %s20
    %s22 = sphi 0, %s20
    %s23 = sphi 0, %s22
    %s37 = sphi 0, %s23
    %s43 = sphi 0, %s45
    %s46 = sphi 0, %s43
    %s47 = sphi 0, %s46
    %s63 = sphi 0, %s47
    %s67 = sphi 0, %s67
    %s69 = sphi 0, %s67
    %s70 = sphi 0, %s69
    %s84 = sphi 0, %s70
    %s88 = sphi 0, %s88
    %s90 = sphi 0, %s88
    %s91 = sphi 0, %s90
    %s105 = sphi 0, %s91
    %s109 = sphi 0, %s109
    %s111 = sphi 0, %s109
    %s112 = sphi 0, %s111
    %s126 = sphi 0, %s112
    %s130 = sphi 0, %s130
    %s132 = sphi 0, %s130
    %s133 = sphi 0, %s132
    %s147 = sphi 0, %s133
    %s153 = sphi 0, %s155
    %s156 = sphi 0, %s153
    %s157 = sphi 0, %s156
    %s173 = sphi 0, %s157
  $region4: #{spp_bottleneck_forward.1} parent=0 // loop_header_branch
    %15 = sbr.rel (%p13) target = $region8
  $region5: #{spp_bottleneck_forward.1} parent=0 // loop_body
    %s17 = ssub.s32 %s12, 1
    %s18 = ssub.s32 %s12, 2
    %s19 = sadd.s32 %s12, 1
    %s21 = sadd.s32 %s20, 1
    %p24 = scmp.eq.s32.totalorder %s12, 1
    %p25 = scmp.ne.s32.totalorder %s20, %s22
    %p26 = scmp.eq.s32.totalorder %s12, 0
    %p27 = por %p25, %p26
    %p28 = scmp.ne.s32.totalorder %s20, %s22
    %p29 = scmp.eq.s32.totalorder %s17, 1
    %p30 = por %p28, %p29
    %p31 = scmp.ne.s32.totalorder %s22, %s23
    %p32 = scmp.eq.s32.totalorder %s17, 0
    %p33 = por %p31, %p32
    %p34 = scmp.ne.s32.totalorder %s22, %s23
    %p35 = scmp.eq.s32.totalorder %s18, 1
    %p36 = por %p34, %p35
    %p38 = scmp.ne.s32.totalorder %s23, %s37
    %p39 = scmp.eq.s32.totalorder %s18, 0
    %p40 = por %p38, %p39
    %s41 = ssub.s32 %s12, %s19
    %p42 = scmp.eq.s32.totalorder %s41, 0
    %s44 = sadd.s32 %s43, 1
    %s45 = scalar_select %p42, %s43, %s44
    %p48 = pneg %p42
    %p49 = scmp.eq.s32.totalorder %s12, 1
    %p50 = por %p48, %p49
    %p51 = scmp.ne.s32.totalorder %s43, %s46
    %p52 = scmp.eq.s32.totalorder %s12, 0
    %p53 = por %p51, %p52
    %p54 = scmp.ne.s32.totalorder %s43, %s46
    %p55 = scmp.eq.s32.totalorder %s17, 1
    %p56 = por %p54, %p55
    %p57 = scmp.ne.s32.totalorder %s46, %s47
    %p58 = scmp.eq.s32.totalorder %s17, 0
    %p59 = por %p57, %p58
    %p60 = scmp.ne.s32.totalorder %s46, %s47
    %p61 = scmp.eq.s32.totalorder %s18, 1
    %p62 = por %p60, %p61
    %p64 = scmp.ne.s32.totalorder %s47, %s63
    %p65 = scmp.eq.s32.totalorder %s18, 0
    %p66 = por %p64, %p65
    %s68 = sadd.s32 %s67, 1
    %p71 = scmp.eq.s32.totalorder %s12, 1
    %p72 = scmp.ne.s32.totalorder %s67, %s69
    %p73 = scmp.eq.s32.totalorder %s12, 0
    %p74 = por %p72, %p73
    %p75 = scmp.ne.s32.totalorder %s67, %s69
    %p76 = scmp.eq.s32.totalorder %s17, 1
    %p77 = por %p75, %p76
    %p78 = scmp.ne.s32.totalorder %s69, %s70
    %p79 = scmp.eq.s32.totalorder %s17, 0
    %p80 = por %p78, %p79
    %p81 = scmp.ne.s32.totalorder %s69, %s70
    %p82 = scmp.eq.s32.totalorder %s18, 1
    %p83 = por %p81, %p82
    %p85 = scmp.ne.s32.totalorder %s70, %s84
    %p86 = scmp.eq.s32.totalorder %s18, 0
    %p87 = por %p85, %p86
    %s89 = sadd.s32 %s88, 1
    %p92 = scmp.eq.s32.totalorder %s12, 1
    %p93 = scmp.ne.s32.totalorder %s88, %s90
    %p94 = scmp.eq.s32.totalorder %s12, 0
    %p95 = por %p93, %p94
    %p96 = scmp.ne.s32.totalorder %s88, %s90
    %p97 = scmp.eq.s32.totalorder %s17, 1
    %p98 = por %p96, %p97
    %p99 = scmp.ne.s32.totalorder %s90, %s91
    %p100 = scmp.eq.s32.totalorder %s17, 0
    %p101 = por %p99, %p100
    %p102 = scmp.ne.s32.totalorder %s90, %s91
    %p103 = scmp.eq.s32.totalorder %s18, 1
    %p104 = por %p102, %p103
    %p106 = scmp.ne.s32.totalorder %s91, %s105
    %p107 = scmp.eq.s32.totalorder %s18, 0
    %p108 = por %p106, %p107
    %s110 = sadd.s32 %s109, 1
    %p113 = scmp.eq.s32.totalorder %s12, 1
    %p114 = scmp.ne.s32.totalorder %s109, %s111
    %p115 = scmp.eq.s32.totalorder %s12, 0
    %p116 = por %p114, %p115
    %p117 = scmp.ne.s32.totalorder %s109, %s111
    %p118 = scmp.eq.s32.totalorder %s17, 1
    %p119 = por %p117, %p118
    %p120 = scmp.ne.s32.totalorder %s111, %s112
    %p121 = scmp.eq.s32.totalorder %s17, 0
    %p122 = por %p120, %p121
    %p123 = scmp.ne.s32.totalorder %s111, %s112
    %p124 = scmp.eq.s32.totalorder %s18, 1
    %p125 = por %p123, %p124
    %p127 = scmp.ne.s32.totalorder %s112, %s126
    %p128 = scmp.eq.s32.totalorder %s18, 0
    %p129 = por %p127, %p128
    %s131 = sadd.s32 %s130, 1
    %p134 = scmp.eq.s32.totalorder %s12, 1
    %p135 = scmp.ne.s32.totalorder %s130, %s132
    %p136 = scmp.eq.s32.totalorder %s12, 0
    %p137 = por %p135, %p136
    %p138 = scmp.ne.s32.totalorder %s130, %s132
    %p139 = scmp.eq.s32.totalorder %s17, 1
    %p140 = por %p138, %p139
    %p141 = scmp.ne.s32.totalorder %s132, %s133
    %p142 = scmp.eq.s32.totalorder %s17, 0
    %p143 = por %p141, %p142
    %p144 = scmp.ne.s32.totalorder %s132, %s133
    %p145 = scmp.eq.s32.totalorder %s18, 1
    %p146 = por %p144, %p145
    %p148 = scmp.ne.s32.totalorder %s133, %s147
    %p149 = scmp.eq.s32.totalorder %s18, 0
    %p150 = por %p148, %p149
    %s151 = ssub.s32 %s12, %s19
    %p152 = scmp.eq.s32.totalorder %s151, 0
    %s154 = sadd.s32 %s153, 1
    %s155 = scalar_select %p152, %s153, %s154
    %p158 = pneg %p152
    %p159 = scmp.eq.s32.totalorder %s12, 1
    %p160 = por %p158, %p159
    %p161 = scmp.ne.s32.totalorder %s153, %s156
    %p162 = scmp.eq.s32.totalorder %s12, 0
    %p163 = por %p161, %p162
    %p164 = scmp.ne.s32.totalorder %s153, %s156
    %p165 = scmp.eq.s32.totalorder %s17, 1
    %p166 = por %p164, %p165
    %p167 = scmp.ne.s32.totalorder %s156, %s157
    %p168 = scmp.eq.s32.totalorder %s17, 0
    %p169 = por %p167, %p168
    %p170 = scmp.ne.s32.totalorder %s156, %s157
    %p171 = scmp.eq.s32.totalorder %s18, 1
    %p172 = por %p170, %p171
    %p174 = scmp.ne.s32.totalorder %s157, %s173
    %p175 = scmp.eq.s32.totalorder %s18, 0
    %p176 = por %p174, %p175
    %p177 = scmp.le.s32.totalorder 1, %s12
    %p178 = scmp.lt.s32.totalorder %s12, 3
    %p179 = pnand %p177, %p178
    %p180 = pneg %p179
    // Predicated region
    $region9: #{spp_bottleneck_forward.1} parent=5 // pred_check
      _
    $region10: #{spp_bottleneck_forward.1} parent=5 // pred_check_branch
      %182 = sbr.rel (%p179) target = $region12
    $region11: #{spp_bottleneck_forward.1} parent=5 // pred_region
      %s183 = ssub.s32 %s12, 1
      // Predicated region
      $region13: #{spp_bottleneck_forward.1} parent=11 // pred_check
        %p184 = pneg %p33
      $region14: #{spp_bottleneck_forward.1} parent=11 // pred_check_branch
        %186 = sbr.rel (%p184) target = $region16
      $region15: #{spp_bottleneck_forward.1} parent=11 // pred_region
        _
      $region16: #{spp_bottleneck_forward.1} parent=11 // pred_fallthru
        _
      // Predicated region
      $region17: #{spp_bottleneck_forward.1} parent=11 // pred_check
        %p187 = pneg %p80
      $region18: #{spp_bottleneck_forward.1} parent=11 // pred_check_branch
        %189 = sbr.rel (%p187) target = $region20
      $region19: #{spp_bottleneck_forward.1} parent=11 // pred_region
        _
      $region20: #{spp_bottleneck_forward.1} parent=11 // pred_fallthru
        _
      // Predicated region
      $region21: #{spp_bottleneck_forward.1} parent=11 // pred_check
        %p190 = pneg %p101
      $region22: #{spp_bottleneck_forward.1} parent=11 // pred_check_branch
        %192 = sbr.rel (%p190) target = $region24
      $region23: #{spp_bottleneck_forward.1} parent=11 // pred_region
        _
      $region24: #{spp_bottleneck_forward.1} parent=11 // pred_fallthru
        _
      // Predicated region
      $region25: #{spp_bottleneck_forward.1} parent=11 // pred_check
        %p193 = pneg %p122
      $region26: #{spp_bottleneck_forward.1} parent=11 // pred_check_branch
        %195 = sbr.rel (%p193) target = $region28
      $region27: #{spp_bottleneck_forward.1} parent=11 // pred_region
        _
      $region28: #{spp_bottleneck_forward.1} parent=11 // pred_fallthru
        _
      // Predicated region
      $region29: #{spp_bottleneck_forward.1} parent=11 // pred_check
        %p196 = pneg %p143
      $region30: #{spp_bottleneck_forward.1} parent=11 // pred_check_branch
        %198 = sbr.rel (%p196) target = $region32
      $region31: #{spp_bottleneck_forward.1} parent=11 // pred_region
        _
      $region32: #{spp_bottleneck_forward.1} parent=11 // pred_fallthru
        _
    $region12: #{spp_bottleneck_forward.1} parent=5 // pred_fallthru
      _
    %p199 = scmp.lt.s32.totalorder %s12, 2
    // Predicated region
    $region33: #{spp_bottleneck_forward.1} parent=5 // pred_check
      %p200 = pneg %p199
    $region34: #{spp_bottleneck_forward.1} parent=5 // pred_check_branch
      %202 = sbr.rel (%p200) target = $region36
    $region35: #{spp_bottleneck_forward.1} parent=5 // pred_region
      // Predicated region
      $region37: #{spp_bottleneck_forward.1} parent=35 // pred_check
        %p203 = pneg %p53
      $region38: #{spp_bottleneck_forward.1} parent=35 // pred_check_branch
        %205 = sbr.rel (%p203) target = $region40
      $region39: #{spp_bottleneck_forward.1} parent=35 // pred_region
        %p206 = scmp.lt.s32.totalorder %s12, 1
        %s207 = scalar_select %p206, %s12, 1
        %s208 = smul.addr %s207, 4
        %s209 = smul.addr %s208, 4
        %s210 = scalar_lea.vmem %s1, %s209
      $region40: #{spp_bottleneck_forward.1} parent=35 // pred_fallthru
        _
    $region36: #{spp_bottleneck_forward.1} parent=5 // pred_fallthru
      _
    %p211 = scmp.le.s32.totalorder 1, %s12
    %p212 = scmp.lt.s32.totalorder %s12, 3
    %p213 = pnand %p211, %p212
    %p214 = pneg %p213
    // Predicated region
    $region41: #{spp_bottleneck_forward.1} parent=5 // pred_check
      _
    $region42: #{spp_bottleneck_forward.1} parent=5 // pred_check_branch
      %216 = sbr.rel (%p213) target = $region44
    $region43: #{spp_bottleneck_forward.1} parent=5 // pred_region
      %s217 = ssub.s32 %s12, 1
      %p218 = pneg %p33
      %p219 = pneg %p30
      %p220 = scmp.lt.s32.totalorder %s17, 1
      %s221 = scalar_select %p220, %s17, 1
      %s222 = smul.addr %s221, 4
      %s223 = smul.addr %s222, 4
      %s224 = scalar_lea.vmem %s1, %s223
      %p225 = pneg %p59
      %p226 = pneg %p56
      %p227 = pneg %p80
      %p228 = pneg %p77
      %p229 = pneg %p101
      %p230 = pneg %p98
      %p231 = pneg %p122
      %p232 = pneg %p119
      %p233 = pneg %p143
      %p234 = pneg %p140
      %p235 = pneg %p169
      %p236 = pneg %p166
      %p237 = scmp.lt.s32.totalorder %s17, 1
      %s238 = scalar_select %p237, %s17, 1
      %s239 = smul.addr %s238, 8
      %s240 = smul.addr %s239, 8
      %s241 = scalar_lea.vmem %s6, %s240
      %p242 = scmp.lt.s32.totalorder %s17, 1
      %s243 = scalar_select %p242, %s17, 1
      %s244 = smul.addr %s243, 4
      %s245 = smul.addr %s244, 4
      %s246 = scalar_lea.vmem %s1, %s245
      %p247 = scmp.lt.s32.totalorder %s17, 1
      %s248 = scalar_select %p247, %s17, 1
      %s249 = smul.addr %s248, 8
      %s250 = smul.addr %s249, 8
      %s251 = scalar_lea.vmem %s6, %s250
      %v253 = vld [vmem:[%s246] sm:$0xff]
      %v254 = vld [vmem:[%s246 + $0x8] sm:$0xff]
      %v255 = vld [vmem:[%s2] sm:$0xf]
      %v256 = vld [vmem:[%s3] sm:$0xff]
      %258 = vset.pattern.permute.xlu0 0
      %259 = vperm.xlu0 %258, %v256
      %v260 = vpop.permute.xlu0 %259
      %v264 = vunpack.c.l.b16 %v253
      %v265 = vunpack.c.h.b16 %v253
      %v266 = vunpack.c.l.b16 %v254
      %v267 = vunpack.c.h.b16 %v254
      %v268 = vpack.c.b16 %v266, %v264
      %v269 = vpack.c.b16 %v267, %v265
      %vm272 = vcmask 130048
      %v274 = vsel %vm272, %v255, 0
      %276 = vmatprep.subr.bf16.mxu0 %v269
      %277 = vmatpush1.bf16.msra.mxu0 %v268
      %278 = vmatprep.subr.bf16.mxu0 0
      %279 = vmatpush1.bf16.msra.mxu0 0
      %280 = vmatprep.subr.bf16.mxu0 0
      %281 = vmatpush1.bf16.msra.mxu0 0
      %282 = vmatprep.subr.bf16.mxu0 0
      %283 = vmatpush1.bf16.msra.mxu0 0
      %284 = vmatprep.subr.bf16.mxu0 0
      %285 = vmatpush1.bf16.msra.mxu0 0
      %286 = vmatprep.subr.bf16.mxu0 0
      %287 = vmatpush1.bf16.msra.mxu0 0
      %288 = vmatprep.subr.bf16.mxu0 0
      %289 = vmatpush1.bf16.msra.mxu0 0
      %290 = vmatprep.subr.bf16.mxu0 0
      %291 = vmatpush1.bf16.msra.mxu0 0
      %292 = vmatprep.subr.bf16.mxu0 0
      %293 = vmatpush1.bf16.msra.mxu0 0
      %294 = vmatprep.subr.bf16.mxu0 0
      %295 = vmatpush1.bf16.msra.mxu0 0
      %296 = vmatprep.subr.bf16.mxu0 0
      %297 = vmatpush1.bf16.msra.mxu0 0
      %298 = vmatprep.subr.bf16.mxu0 0
      %299 = vmatpush1.bf16.msra.mxu0 0
      %300 = vmatprep.subr.bf16.mxu0 0
      %301 = vmatpush1.bf16.msra.mxu0 0
      %302 = vmatprep.subr.bf16.mxu0 0
      %303 = vmatpush1.bf16.msra.mxu0 0
      %304 = vmatprep.subr.bf16.mxu0 0
      %305 = vmatpush1.bf16.msra.mxu0 0
      %306 = vmatprep.subr.bf16.mxu0 0
      %307 = vmatpush1.bf16.msra.mxu0 0
      %308 = vmatprep.mubr.bf16.mxu0 0
      %309 = vmatmul.mubr.bf16.gmra.mrb[0].mxu0 %v274
      %v310 = vpop.f32.mrb[0].mxu0
      %v311 = vadd.f32 %v260, %v310
      %v312 = vpop.f32.mrb[0].mxu0
      %v313 = vadd.f32 %v260, %v312
      %v314 = vpop.f32.mrb[0].mxu0
      %v315 = vpop.f32.mrb[0].mxu0
      %316 = vdwg.mxu0
      %v317 = vsub.f32 0.0, %v311
      %v318 = vsub.f32 0.0, %v313
      %v319 = vmul.f32 %v317, 1.442695
      %v320 = vpow.pop %v319
      %v321 = vmul.f32 %v318, 1.442695
      %v322 = vpow.pop %v321
      %v323 = vadd.f32 %v320, 1.0
      %v324 = vadd.f32 %v322, 1.0
      %v325 = vrcp.pop %v323
      %v326 = vrcp.pop %v324
      %v327 = vmul.f32 %v311, %v325
      %v328 = vmul.f32 %v313, %v326
      %v329 = vld [vmem:[%s0] sm:$0x3]
      %v330 = vlaneseq
      %v331 = vand.u32 %v330, 127
      %v332 = vadd.s32 %v331, 128
      %vm333 = vcmp.eq.s32.totalorder %v329, 0
      %vm334 = vcmp.eq.s32.totalorder %v329, 15
      %vm335 = vcmp.lt.s32.totalorder %v331, 16
      %vm336 = vcmp.lt.s32.totalorder %v332, 16
      %vm337 = vcmp.ge.s32.totalorder %v331, 240
      %vm338 = vcmp.ge.s32.totalorder %v332, 240
      %339 = vrot.lane.b32.xlu0 %v327, 127
      %v340 = vpop.permute.xlu0 %339
      %341 = vrot.lane.b32.xlu0 %v328, 127
      %v342 = vpop.permute.xlu0 %341
      %vm343 = vcmp.lt.s32.totalorder %v331, 127
      %v344 = vsel %vm343, %v340, %v342
      %v345 = vsel %vm343, %v342, %v340
      %v346 = vsel %vm334, 1, 0
      %v347 = vlaneseq
      %v348 = vshrl.u32 %v347, 7
      %v349 = vsub.s32 0, %v348
      %v350 = vrot.slane %v346, %v349
      %v351 = vlaneseq
      %v352 = vshrl.u32 %v351, 7
      %v353 = vsub.s32 1, %v352
      %v354 = vrot.slane %v346, %v353
      %vm355 = vcmp.eq.s32.totalorder %v350, 1
      %vm356 = vcmp.eq.s32.totalorder %v354, 1
      %v357 = vsel %vm355, -inf, %v344
      %v358 = vsel %vm356, -inf, %v345
      %359 = vrot.lane.b32.xlu0 %v327, 1
      %v360 = vpop.permute.xlu0 %359
      %361 = vrot.lane.b32.xlu0 %v328, 1
      %v362 = vpop.permute.xlu0 %361
      %vm363 = vcmp.lt.s32.totalorder %v331, 1
      %v364 = vsel %vm363, %v360, %v362
      %v365 = vsel %vm363, %v362, %v360
      %v366 = vsel %vm333, 1, 0
      %v367 = vlaneseq
      %v368 = vshrl.u32 %v367, 7
      %v369 = vsub.s32 0, %v368
      %v370 = vrot.slane %v366, %v369
      %v371 = vlaneseq
      %v372 = vshrl.u32 %v371, 7
      %v373 = vsub.s32 1, %v372
      %v374 = vrot.slane %v366, %v373
      %vm375 = vcmp.eq.s32.totalorder %v370, 1
      %vm376 = vcmp.eq.s32.totalorder %v374, 1
      %v377 = vsel %vm375, -inf, %v365
      %v378 = vsel %vm376, -inf, %v364
      %v379 = vmax.f32 %v357, %v377
      %v380 = vmax.f32 %v358, %v378
      %v381 = vmax.f32 %v327, %v379
      %v382 = vmax.f32 %v328, %v380
      %383 = vrot.lane.b32.xlu0 %v381, 112
      %v384 = vpop.permute.xlu0 %383
      %385 = vrot.lane.b32.xlu0 %v382, 112
      %v386 = vpop.permute.xlu0 %385
      %vm387 = vcmp.lt.s32.totalorder %v331, 112
      %v388 = vsel %vm387, %v384, %v386
      %v389 = vsel %vm387, %v386, %v384
      %v390 = vsel %vm337, 1, 0
      %v391 = vsel %vm338, 1, 0
      %vm392 = vcmp.eq.s32.totalorder %v390, 1
      %vm393 = vcmp.eq.s32.totalorder %v391, 1
      %v394 = vsel %vm392, -inf, %v388
      %v395 = vsel %vm393, -inf, %v389
      %396 = vrot.lane.b32.xlu0 %v381, 16
      %v397 = vpop.permute.xlu0 %396
      %398 = vrot.lane.b32.xlu0 %v382, 16
      %v399 = vpop.permute.xlu0 %398
      %v400 = vsel %vm335, %v397, %v399
      %v401 = vsel %vm335, %v399, %v397
      %v402 = vsel %vm335, 1, 0
      %v403 = vsel %vm336, 1, 0
      %vm404 = vcmp.eq.s32.totalorder %v402, 1
      %vm405 = vcmp.eq.s32.totalorder %v403, 1
      %v406 = vsel %vm404, -inf, %v401
      %v407 = vsel %vm405, -inf, %v400
      %v408 = vmax.f32 %v394, %v406
      %v409 = vmax.f32 %v395, %v407
      %v410 = vmax.f32 %v381, %v408
      %v411 = vmax.f32 %v382, %v409
      %412 = vrot.lane.b32.xlu0 %v410, 127
      %v413 = vpop.permute.xlu0 %412
      %414 = vrot.lane.b32.xlu0 %v411, 127
      %v415 = vpop.permute.xlu0 %414
      %v416 = vsel %vm343, %v413, %v415
      %v417 = vsel %vm343, %v415, %v413
      %v418 = vsel %vm355, -inf, %v416
      %v419 = vsel %vm356, -inf, %v417
      %420 = vrot.lane.b32.xlu0 %v410, 1
      %v421 = vpop.permute.xlu0 %420
      %422 = vrot.lane.b32.xlu0 %v411, 1
      %v423 = vpop.permute.xlu0 %422
      %v424 = vsel %vm363, %v421, %v423
      %v425 = vsel %vm363, %v423, %v421
      %v426 = vsel %vm375, -inf, %v425
      %v427 = vsel %vm376, -inf, %v424
      %v428 = vmax.f32 %v418, %v426
      %v429 = vmax.f32 %v419, %v427
      %v430 = vmax.f32 %v410, %v428
      %v431 = vmax.f32 %v411, %v429
      %432 = vrot.lane.b32.xlu0 %v430, 112
      %v433 = vpop.permute.xlu0 %432
      %434 = vrot.lane.b32.xlu0 %v431, 112
      %v435 = vpop.permute.xlu0 %434
      %v436 = vsel %vm387, %v433, %v435
      %v437 = vsel %vm387, %v435, %v433
      %v438 = vsel %vm392, -inf, %v436
      %v439 = vsel %vm393, -inf, %v437
      %440 = vrot.lane.b32.xlu0 %v430, 16
      %v441 = vpop.permute.xlu0 %440
      %442 = vrot.lane.b32.xlu0 %v431, 16
      %v443 = vpop.permute.xlu0 %442
      %v444 = vsel %vm335, %v441, %v443
      %v445 = vsel %vm335, %v443, %v441
      %v446 = vsel %vm404, -inf, %v445
      %v447 = vsel %vm405, -inf, %v444
      %v448 = vmax.f32 %v438, %v446
      %v449 = vmax.f32 %v439, %v447
      %v450 = vmax.f32 %v430, %v448
      %v451 = vmax.f32 %v431, %v449
      %452 = vrot.lane.b32.xlu0 %v450, 127
      %v453 = vpop.permute.xlu0 %452
      %454 = vrot.lane.b32.xlu0 %v451, 127
      %v455 = vpop.permute.xlu0 %454
      %v456 = vsel %vm343, %v453, %v455
      %v457 = vsel %vm343, %v455, %v453
      %v458 = vsel %vm355, -inf, %v456
      %v459 = vsel %vm356, -inf, %v457
      %460 = vrot.lane.b32.xlu0 %v450, 1
      %v461 = vpop.permute.xlu0 %460
      %462 = vrot.lane.b32.xlu0 %v451, 1
      %v463 = vpop.permute.xlu0 %462
      %v464 = vsel %vm363, %v461, %v463
      %v465 = vsel %vm363, %v463, %v461
      %v466 = vsel %vm375, -inf, %v465
      %v467 = vsel %vm376, -inf, %v464
      %v468 = vmax.f32 %v458, %v466
      %v469 = vmax.f32 %v459, %v467
      %v470 = vmax.f32 %v450, %v468
      %v471 = vmax.f32 %v451, %v469
      %472 = vrot.lane.b32.xlu0 %v470, 112
      %v473 = vpop.permute.xlu0 %472
      %474 = vrot.lane.b32.xlu0 %v471, 112
      %v475 = vpop.permute.xlu0 %474
      %v476 = vsel %vm387, %v473, %v475
      %v477 = vsel %vm387, %v475, %v473
      %v478 = vsel %vm392, -inf, %v476
      %v479 = vsel %vm393, -inf, %v477
      %480 = vrot.lane.b32.xlu0 %v470, 16
      %v481 = vpop.permute.xlu0 %480
      %482 = vrot.lane.b32.xlu0 %v471, 16
      %v483 = vpop.permute.xlu0 %482
      %v484 = vsel %vm335, %v481, %v483
      %v485 = vsel %vm335, %v483, %v481
      %v486 = vsel %vm404, -inf, %v485
      %v487 = vsel %vm405, -inf, %v484
      %v488 = vmax.f32 %v478, %v486
      %v489 = vmax.f32 %v479, %v487
      %v490 = vmax.f32 %v470, %v488
      %v491 = vmax.f32 %v471, %v489
      %v492 = vpack.c.bf16 %v410, %v327
      %v493 = vpack.c.bf16 %v411, %v328
      %v494 = vpack.c.bf16 %v490, %v450
      %v495 = vpack.c.bf16 %v491, %v451
      %v496 = vld [vmem:[%s4] sm:$0xf]
      %v497 = vld [vmem:[%s4 + $0x4] sm:$0xf]
      %v498 = vld [vmem:[%s4 + $0x8] sm:$0xf]
      %v499 = vld [vmem:[%s4 + $0xc] sm:$0xf]
      %v500 = vld [vmem:[%s5] sm:$0xff]
      %v501 = vld [vmem:[%s5 + $0x8] sm:$0xff]
      %v502 = vld [vmem:[%s5 + $0x10] sm:$0xff]
      %v503 = vld [vmem:[%s5 + $0x18] sm:$0xff]
      %505 = vset.pattern.permute.xlu0 0
      %506 = vperm.xlu0 %505, %v500
      %v507 = vpop.permute.xlu0 %506
      %510 = vset.pattern.permute.xlu0 0
      %511 = vperm.xlu0 %510, %v501
      %v512 = vpop.permute.xlu0 %511
      %515 = vset.pattern.permute.xlu0 0
      %516 = vperm.xlu0 %515, %v502
      %v517 = vpop.permute.xlu0 %516
      %520 = vset.pattern.permute.xlu0 0
      %521 = vperm.xlu0 %520, %v503
      %v522 = vpop.permute.xlu0 %521
      %v528 = vunpack.c.l.b16 %v496
      %v529 = vunpack.c.l.b16 %v497
      %v530 = vunpack.c.l.b16 %v498
      %v531 = vunpack.c.l.b16 %v499
      %v532 = vpack.c.b16 %v529, %v528
      %v533 = vpack.c.b16 %v531, %v530
      %vm534 = vcmask 261120
      %v536 = vsel %vm534, %v532, 0
      %v539 = vsel %vm534, %v533, 0
      %541 = vmatprep.subr.bf16.mxu0 %v493
      %542 = vmatpush1.bf16.msra.mxu0 %v492
      %543 = vmatprep.subr.bf16.mxu0 %v495
      %544 = vmatpush1.bf16.msra.mxu0 %v494
      %545 = vmatprep.subr.bf16.mxu0 0
      %546 = vmatpush1.bf16.msra.mxu0 0
      %547 = vmatprep.subr.bf16.mxu0 0
      %548 = vmatpush1.bf16.msra.mxu0 0
      %549 = vmatprep.subr.bf16.mxu0 0
      %550 = vmatpush1.bf16.msra.mxu0 0
      %551 = vmatprep.subr.bf16.mxu0 0
      %552 = vmatpush1.bf16.msra.mxu0 0
      %553 = vmatprep.subr.bf16.mxu0 0
      %554 = vmatpush1.bf16.msra.mxu0 0
      %555 = vmatprep.subr.bf16.mxu0 0
      %556 = vmatpush1.bf16.msra.mxu0 0
      %557 = vmatprep.subr.bf16.mxu0 0
      %558 = vmatpush1.bf16.msra.mxu0 0
      %559 = vmatprep.subr.bf16.mxu0 0
      %560 = vmatpush1.bf16.msra.mxu0 0
      %561 = vmatprep.subr.bf16.mxu0 0
      %562 = vmatpush1.bf16.msra.mxu0 0
      %563 = vmatprep.subr.bf16.mxu0 0
      %564 = vmatpush1.bf16.msra.mxu0 0
      %565 = vmatprep.subr.bf16.mxu0 0
      %566 = vmatpush1.bf16.msra.mxu0 0
      %567 = vmatprep.subr.bf16.mxu0 0
      %568 = vmatpush1.bf16.msra.mxu0 0
      %569 = vmatprep.subr.bf16.mxu0 0
      %570 = vmatpush1.bf16.msra.mxu0 0
      %571 = vmatprep.subr.bf16.mxu0 0
      %572 = vmatpush1.bf16.msra.mxu0 0
      %573 = vmatprep.mubr.bf16.mxu0 0
      %574 = vmatmul.mubr.bf16.gmra.mrb[0].mxu0 %v536
      %v575 = vpop.f32.mrb[0].mxu0
      %v576 = vadd.f32 %v507, %v575
      %v577 = vpop.f32.mrb[0].mxu0
      %v578 = vadd.f32 %v507, %v577
      %v579 = vpop.f32.mrb[0].mxu0
      %v580 = vadd.f32 %v512, %v579
      %v581 = vpop.f32.mrb[0].mxu0
      %v582 = vadd.f32 %v512, %v581
      %583 = vmatprep.mubr.bf16.mxu0 0
      %584 = vmatmul.mubr.bf16.gmra.mrb[0].mxu0 %v539
      %v585 = vpop.f32.mrb[0].mxu0
      %v586 = vadd.f32 %v517, %v585
      %v587 = vpop.f32.mrb[0].mxu0
      %v588 = vadd.f32 %v517, %v587
      %v589 = vpop.f32.mrb[0].mxu0
      %v590 = vadd.f32 %v522, %v589
      %v591 = vpop.f32.mrb[0].mxu0
      %v592 = vadd.f32 %v522, %v591
      %593 = vdwg.mxu0
      %v594 = vsub.f32 0.0, %v576
      %v595 = vsub.f32 0.0, %v578
      %v596 = vsub.f32 0.0, %v580
      %v597 = vsub.f32 0.0, %v582
      %v598 = vsub.f32 0.0, %v586
      %v599 = vsub.f32 0.0, %v588
      %v600 = vsub.f32 0.0, %v590
      %v601 = vsub.f32 0.0, %v592
      %v602 = vmul.f32 %v594, 1.442695
      %v603 = vpow.pop %v602
      %v604 = vmul.f32 %v595, 1.442695
      %v605 = vpow.pop %v604
      %v606 = vmul.f32 %v596, 1.442695
      %v607 = vpow.pop %v606
      %v608 = vmul.f32 %v597, 1.442695
      %v609 = vpow.pop %v608
      %v610 = vmul.f32 %v598, 1.442695
      %v611 = vpow.pop %v610
      %v612 = vmul.f32 %v599, 1.442695
      %v613 = vpow.pop %v612
      %v614 = vmul.f32 %v600, 1.442695
      %v615 = vpow.pop %v614
      %v616 = vmul.f32 %v601, 1.442695
      %v617 = vpow.pop %v616
      %v618 = vadd.f32 %v603, 1.0
      %v619 = vadd.f32 %v605, 1.0
      %v620 = vadd.f32 %v607, 1.0
      %v621 = vadd.f32 %v609, 1.0
      %v622 = vadd.f32 %v611, 1.0
      %v623 = vadd.f32 %v613, 1.0
      %v624 = vadd.f32 %v615, 1.0
      %v625 = vadd.f32 %v617, 1.0
      %v626 = vrcp.pop %v618
      %v627 = vrcp.pop %v619
      %v628 = vrcp.pop %v620
      %v629 = vrcp.pop %v621
      %v630 = vrcp.pop %v622
      %v631 = vrcp.pop %v623
      %v632 = vrcp.pop %v624
      %v633 = vrcp.pop %v625
      %v634 = vmul.f32 %v576, %v626
      %v635 = vmul.f32 %v578, %v627
      %v636 = vmul.f32 %v580, %v628
      %v637 = vmul.f32 %v582, %v629
      %v638 = vmul.f32 %v586, %v630
      %v639 = vmul.f32 %v588, %v631
      %v640 = vmul.f32 %v590, %v632
      %v641 = vmul.f32 %v592, %v633
      %642 = vst [vmem:[%s251] sm:$0xff] %v634
      %643 = vst [vmem:[%s251 + $0x8] sm:$0xff] %v635
      %644 = vst [vmem:[%s251 + $0x10] sm:$0xff] %v636
      %645 = vst [vmem:[%s251 + $0x18] sm:$0xff] %v637
      %646 = vst [vmem:[%s251 + $0x20] sm:$0xff] %v638
      %647 = vst [vmem:[%s251 + $0x28] sm:$0xff] %v639
      %648 = vst [vmem:[%s251 + $0x30] sm:$0xff] %v640
      %649 = vst [vmem:[%s251 + $0x38] sm:$0xff] %v641
      %p650 = scmp.lt.s32.totalorder %s17, 1
      %s651 = scalar_select %p650, %s17, 1
      %s652 = smul.addr %s651, 8
      %s653 = smul.addr %s652, 8
      %s654 = scalar_lea.vmem %s6, %s653
      // Predicated region
      $region45: #{spp_bottleneck_forward.1} parent=43 // pred_check
        %p655 = pneg %p166
      $region46: #{spp_bottleneck_forward.1} parent=43 // pred_check_branch
        %657 = sbr.rel (%p655) target = $region48
      $region47: #{spp_bottleneck_forward.1} parent=43 // pred_region
        _
      $region48: #{spp_bottleneck_forward.1} parent=43 // pred_fallthru
        _
    $region44: #{spp_bottleneck_forward.1} parent=5 // pred_fallthru
      _
    %p658 = scmp.le.s32.totalorder 2, %s12
    // Predicated region
    $region49: #{spp_bottleneck_forward.1} parent=5 // pred_check
      %p659 = pneg %p658
    $region50: #{spp_bottleneck_forward.1} parent=5 // pred_check_branch
      %661 = sbr.rel (%p659) target = $region52
    $region51: #{spp_bottleneck_forward.1} parent=5 // pred_region
      %s662 = ssub.s32 %s12, 2
      // Predicated region
      $region53: #{spp_bottleneck_forward.1} parent=51 // pred_check
        %p663 = pneg %p172
      $region54: #{spp_bottleneck_forward.1} parent=51 // pred_check_branch
        %665 = sbr.rel (%p663) target = $region56
      $region55: #{spp_bottleneck_forward.1} parent=51 // pred_region
        %p666 = scmp.lt.s32.totalorder %s18, 1
        %s667 = scalar_select %p666, %s18, 1
        %s668 = smul.addr %s667, 8
        %s669 = smul.addr %s668, 8
        %s670 = scalar_lea.vmem %s6, %s669
      $region56: #{spp_bottleneck_forward.1} parent=51 // pred_fallthru
        _
    $region52: #{spp_bottleneck_forward.1} parent=5 // pred_fallthru
      _
  $region6: #{spp_bottleneck_forward.1} parent=0 // loop_footer
    %s16 = sadd.s32 1, %s12
  $region7: #{spp_bottleneck_forward.1} parent=0 // loop_footer_branch
    %11 = sbr.rel target = $region3
  $region8: #{spp_bottleneck_forward.1} parent=0 // loop_exit
    _

</llo_original>
